<compile_context>
chip_gen: v5e
topology: v5e:2x2
jax: 0.10.0
libtpu: 0.0.40
codegen_flags: <defaults>
</compile_context>

<pallas_src>
import jax
import jax.numpy as jnp
from jax.experimental import pallas as pl
from jax.experimental.pallas import tpu as pltpu

# ----------------------------- model config ---------------------------------
K = 4              # number of clusters
DIM_ZT = 32
DIM_ZI = 32
MU_P_WT = 1.0
COS_EPS = 1e-6
F32 = jnp.float32
BF16 = jnp.bfloat16

# MTVAE's input_treat is a binary indicator matrix, so int8 storage is exact
# and halves the dominant HBM read versus bf16.  Set to jnp.bfloat16 for
# general real-valued treatment matrices (mirrored in the reference below).
TREAT_STORE_DTYPE = jnp.int8


def _softmax_rows(x):
    m = jnp.max(x, axis=1, keepdims=True)
    e = jnp.exp(x - m)
    return e / jnp.sum(e, axis=1, keepdims=True)


# --------------------------- kernel 1: encode -------------------------------
def mtvae_encode_kernel(
    # N-tiled inputs
    treat_ref, w_mlzt_ref,
    # small, fully resident inputs
    b_mlzt_ref, ins_ref, w_mlzi_ref, b_mlzi_ref,
    mu_p_ref, w_y1_ref, b_y1_ref, w_y2row_ref, b_y2_ref,
    # outputs
    mu_lv_zt_out, zt_bf_out, cates_out, mu_lv_zi_out, a_pred_out, mu_y_out,
    # scratch
    zt_acc,
):
    n = pl.program_id(0)
    nt = pl.num_programs(0)

    @pl.when(n == 0)
    def _init():
        zt_acc[...] = jnp.zeros_like(zt_acc)

    # Fused [mu_zt || logvar_zt] partial contraction for this N tile.
    # treat tile: int8 (binary) widened on the VPU; w_mlzt: lane-dense
    # transposed (2*DIM_ZT, TN) bf16 slab; contraction on the last dims.
    zt_acc[...] += jax.lax.dot_general(
        treat_ref[...].astype(BF16), w_mlzt_ref[...],
        dimension_numbers=(((1,), (1,)), ((), ())),
        preferred_element_type=F32)

    # ---------------- last N tile: all T/B-sized tail work -------------------
    @pl.when(n == nt - 1)
    def _tail():
        B, T = ins_ref.shape
        mu_lv = zt_acc[...] + b_mlzt_ref[...]              # (T, 2*DIM_ZT)
        mu_lv_zt_out[...] = mu_lv
        zt = mu_lv[:, :DIM_ZT]                             # eval: zt == mu_zt
        zt_bf_out[...] = zt.astype(BF16)                   # for the arec pass

        # ---- compute_qc: cosine similarity vs. cluster prototypes ----------
        mu_p = MU_P_WT * mu_p_ref[...]                     # (K, DIM_ZT)
        dots = jax.lax.dot_general(                        # zt @ mu_p^T, no .T
            zt, mu_p, (((1,), (1,)), ((), ())),
            preferred_element_type=F32)                    # (T, K)
        zt_sq = jnp.sum(zt * zt, axis=1, keepdims=True)    # (T, 1)
        p_sq = jnp.sum(mu_p * mu_p, axis=1, keepdims=True) # (K, 1)
        inv_nrm = jax.lax.rsqrt(                           # EUP rsqrt
            jnp.maximum(zt_sq * jnp.transpose(p_sq), COS_EPS * COS_EPS))
        qc = _softmax_rows(dots * inv_nrm * 10.0)          # (T, K) == cates
        cates_out[...] = qc
        # encode_i (eval): softmax of the already-softmaxed qc
        c_kt = jnp.transpose(_softmax_rows(qc))            # (K, T), tiny, once

        ins = ins_ref[...]                                 # (B, T)
        w_mlzi = w_mlzi_ref[...]                           # (T, 2*DIM_ZI)
        b_mlzi = b_mlzi_ref[...]                           # (1, 2*DIM_ZI)

        # ---- y-head prep: rep_w1 with the y_pred_2 row folded in -----------
        a_zt = jnp.dot(ins, zt, preferred_element_type=F32)        # (B, DIM_ZT)
        r = (jnp.dot(a_zt, w_y1_ref[...], preferred_element_type=F32)
             + b_y1_ref[...] + w_y2row_ref[...])           # (B, K*DIM_ZI)

        # ---- encode_i + decoder + y-head, per cluster -----------------------
        # K is tiny and static: an unrolled loop of 2-D dots keeps every
        # operand a well-supported (B, .) tile, stores along the leading axis
        # of the (K, B, 2*DIM_ZI) output, and never materializes a (K*B, .)
        # slab (no sublane-crossing concatenations / slices in the tail).
        probs = jnp.zeros((B, T), F32)
        mu_y = jnp.zeros((B, 1), F32)
        for kk in range(K):
            ck = c_kt[kk:kk + 1, :]                                  # (1, T)
            x_k = ins * ck                                           # (B, T)
            mlv_k = (jnp.dot(x_k, w_mlzi, preferred_element_type=F32)
                     + b_mlzi)                                       # (B, 2*DIM_ZI)
            mu_lv_zi_out[kk] = mlv_k
            mu_k = mlv_k[:, :DIM_ZI]                                 # eval: zi == mu
            a_k = jax.nn.sigmoid(jax.lax.dot_general(                # mu_k @ zt^T
                mu_k, zt, (((1,), (1,)), ((), ())),
                preferred_element_type=F32))                         # (B, T)
            probs = probs + a_k * ck
            mu_y = mu_y + jnp.sum(
                mu_k * r[:, kk * DIM_ZI:(kk + 1) * DIM_ZI],
                axis=1, keepdims=True)
        a_pred_out[...] = probs
        mu_y_out[...] = mu_y + b_y2_ref[...]


# ---------------------- kernel 2: a_reconstby_zt stream ----------------------
def mtvae_arec_kernel(zt_ref, w_arec_ref, b_arec_ref, arec_out):
    a = jnp.dot(zt_ref[...], w_arec_ref[...], preferred_element_type=F32)
    arec_out[...] = jax.nn.sigmoid(a + b_arec_ref[...].astype(F32)).astype(BF16)


# ------------------------------ tiling helpers -------------------------------
def _vmem_profile():
    """(tile budget bytes, vmem_limit_bytes) chosen per TPU generation."""
    kind = ""
    try:
        kind = jax.devices()[0].device_kind.lower()
    except Exception:
        pass
    if "v5" in kind or "v6" in kind:
        # v5e / v6e: 128 MiB physical VMEM -> large tiles are safe.
        return 80 * 2**20, 100 * 2**20
    # v7x (64 MiB per-TC) and unknown chips: leave compiler headroom.
    return 32 * 2**20, 48 * 2**20


def _ceil_to(a, b):
    return -(-a // b) * b


def _choose_n_tiling(n, t, treat_bytes, budget_bytes):
    """Pick the N tile (multiple of 128) from an explicit VMEM budget; return
    (TN, N_pad).  Per-column cost counts the double-buffered tiles of both
    calls plus the in-kernel bf16 widen of the int8 treat tile."""
    per_col = max(
        2 * (t * treat_bytes + 2 * 2 * DIM_ZT) + 2 * t,   # encode call
        2 * (2 * DIM_ZT + 2 + 2 * t),                      # arec call
    )
    max_cols = max(128, (budget_bytes // per_col) // 128 * 128)
    if n <= max_cols:
        return n, n                      # single full-extent tile, no padding
    max_cols = min(max_cols, 16384)      # diminishing returns beyond ~16K cols
    steps = -(-n // max_cols)
    tn = _ceil_to(-(-n // steps), 128)
    return tn, steps * tn


def _pad_last(x, n_pad):
    n = x.shape[-1]
    if n == n_pad:
        return x
    return jnp.pad(x, [(0, 0)] * (x.ndim - 1) + [(0, n_pad - n)])


# ------------------------------ params ---------------------------------------
def make_params(num_train_samples, num_treatments, key):
    """Deterministic parameter init (PyTorch-like Linear uniform init)."""
    ks = jax.random.split(key, 16)

    def linear(kw, kb, fan_in, fan_out):
        bound = 1.0 / jnp.sqrt(jnp.asarray(fan_in, F32))
        w = jax.random.uniform(kw, (fan_in, fan_out), F32, -bound, bound)
        b = jax.random.uniform(kb, (1, fan_out), F32, -bound, bound)
        return w, b

    N, T = num_train_samples, num_treatments
    p = {}
    p["w_mu_zt"], p["b_mu_zt"] = linear(ks[0], ks[1], N, DIM_ZT)
    p["w_lv_zt"], p["b_lv_zt"] = linear(ks[2], ks[3], N, DIM_ZT)
    p["w_arec"], p["b_arec"] = linear(ks[4], ks[5], DIM_ZT, N)
    p["w_mu_zi"], p["b_mu_zi"] = linear(ks[6], ks[7], T, DIM_ZI)
    p["w_lv_zi"], p["b_lv_zi"] = linear(ks[8], ks[9], T, DIM_ZI)
    p["mu_p_zt"] = jax.random.normal(ks[10], (K, DIM_ZT), F32)
    p["logvar_p_zt"] = jnp.ones((K, DIM_ZT), F32)
    p["w_y1"], p["b_y1"] = linear(ks[11], ks[12], DIM_ZT, K * DIM_ZI)
    p["w_y2"], p["b_y2"] = linear(ks[13], ks[14], K * DIM_ZI, 1)
    return p


# ------------------------------ wrapper ---------------------------------------
@jax.jit
def mtvae_forward(params, input_ins, input_treat):
    B, T = input_ins.shape
    T2, N = input_treat.shape
    assert T == T2

    budget, vmem_limit = _vmem_profile()
    tbytes = jnp.dtype(TREAT_STORE_DTYPE).itemsize
    TN, N_pad = _choose_n_tiling(N, T, tbytes, budget)
    NT = N_pad // TN

    # Fuse / transpose / cast parameters for the kernels.  In production, do
    # this once outside the step function so the packed copies live in HBM.
    w_mlzt_t = jnp.concatenate([params["w_mu_zt"], params["w_lv_zt"]],
                               axis=1).T.astype(BF16)        # (2*DIM_ZT, N) lane-dense
    b_mlzt = jnp.concatenate([params["b_mu_zt"], params["b_lv_zt"]], axis=1)
    w_mlzi = jnp.concatenate([params["w_mu_zi"], params["w_lv_zi"]], axis=1)
    b_mlzi = jnp.concatenate([params["b_mu_zi"], params["b_lv_zi"]], axis=1)
    w_arec = params["w_arec"].astype(BF16)                   # (DIM_ZT, N)
    b_arec = params["b_arec"].astype(BF16)                   # (1, N)
    w_y2row = params["w_y2"].T                               # (1, K*DIM_ZI)

    treat_store = _pad_last(input_treat.astype(TREAT_STORE_DTYPE), N_pad)
    w_mlzt_t = _pad_last(w_mlzt_t, N_pad)
    w_arec = _pad_last(w_arec, N_pad)
    b_arec = _pad_last(b_arec, N_pad)

    # ------------------------- call 1: encode + tail -------------------------
    enc_in_specs = [
        pl.BlockSpec((T, TN), lambda n: (0, n)),                   # treat (int8)
        pl.BlockSpec((2 * DIM_ZT, TN), lambda n: (0, n)),          # w_mlzt^T (bf16)
        pl.BlockSpec((1, 2 * DIM_ZT), lambda n: (0, 0)),           # b_mlzt
        pl.BlockSpec((B, T), lambda n: (0, 0)),                    # ins
        pl.BlockSpec((T, 2 * DIM_ZI), lambda n: (0, 0)),           # w_mlzi
        pl.BlockSpec((1, 2 * DIM_ZI), lambda n: (0, 0)),           # b_mlzi
        pl.BlockSpec((K, DIM_ZT), lambda n: (0, 0)),               # mu_p_zt
        pl.BlockSpec((DIM_ZT, K * DIM_ZI), lambda n: (0, 0)),      # w_y1
        pl.BlockSpec((1, K * DIM_ZI), lambda n: (0, 0)),           # b_y1
        pl.BlockSpec((1, K * DIM_ZI), lambda n: (0, 0)),           # w_y2 row
        pl.BlockSpec((1, 1), lambda n: (0, 0)),                    # b_y2
    ]
    enc_out_specs = (
        pl.BlockSpec((T, 2 * DIM_ZT), lambda n: (0, 0)),           # mu||lv zt
        pl.BlockSpec((T, DIM_ZT), lambda n: (0, 0)),               # zt (bf16)
        pl.BlockSpec((T, K), lambda n: (0, 0)),                    # cates
        pl.BlockSpec((K, B, 2 * DIM_ZI), lambda n: (0, 0, 0)),     # mu||lv zi
        pl.BlockSpec((B, T), lambda n: (0, 0)),                    # a_pred
        pl.BlockSpec((B, 1), lambda n: (0, 0)),                    # mu_y
    )
    enc_out_shape = (
        jax.ShapeDtypeStruct((T, 2 * DIM_ZT), F32),
        jax.ShapeDtypeStruct((T, DIM_ZT), BF16),
        jax.ShapeDtypeStruct((T, K), F32),
        jax.ShapeDtypeStruct((K, B, 2 * DIM_ZI), F32),
        jax.ShapeDtypeStruct((B, T), F32),
        jax.ShapeDtypeStruct((B, 1), F32),
    )
    enc_flops = (2 * T * N_pad * 2 * DIM_ZT
                 + 2 * T * DIM_ZT * K
                 + K * (2 * B * T * 2 * DIM_ZI + 2 * B * DIM_ZI * T)
                 + 2 * B * T * DIM_ZT + 2 * B * DIM_ZT * K * DIM_ZI)
    enc_bytes = (tbytes * T * N_pad + 2 * 2 * DIM_ZT * N_pad
                 + 4 * (B * T + T * 2 * DIM_ZI + K * DIM_ZT
                        + DIM_ZT * K * DIM_ZI + 2 * K * DIM_ZI
                        + T * 2 * DIM_ZT + T * K + K * B * 2 * DIM_ZI
                        + B * T + B)
                 + 2 * T * DIM_ZT)

    (mu_lv_zt, zt_bf, cates, mu_lv_zi, a_pred, mu_y) = pl.pallas_call(
        mtvae_encode_kernel,
        out_shape=enc_out_shape,
        grid_spec=pltpu.PrefetchScalarGridSpec(
            num_scalar_prefetch=0,
            grid=(NT,),
            in_specs=enc_in_specs,
            out_specs=enc_out_specs,
            scratch_shapes=[pltpu.VMEM((T, 2 * DIM_ZT), F32)],
        ),
        compiler_params=pltpu.CompilerParams(
            dimension_semantics=("arbitrary",),        # N reduction
            vmem_limit_bytes=vmem_limit,
        ),
        cost_estimate=pl.CostEstimate(
            flops=enc_flops, transcendentals=2 * T * K + K * B * T,
            bytes_accessed=enc_bytes),
    )(treat_store, w_mlzt_t, b_mlzt, input_ins, w_mlzi, b_mlzi,
      params["mu_p_zt"], params["w_y1"], params["b_y1"], w_y2row,
      params["b_y2"])

    # ---------------------- call 2: a_reconstby_zt stream ---------------------
    rec_flops = 2 * T * DIM_ZT * N_pad
    rec_bytes = 2 * DIM_ZT * N_pad + 2 * N_pad + 2 * T * N_pad + 2 * T * DIM_ZT
    arec_pad = pl.pallas_call(
        mtvae_arec_kernel,
        out_shape=jax.ShapeDtypeStruct((T, N_pad), BF16),
        grid_spec=pltpu.PrefetchScalarGridSpec(
            num_scalar_prefetch=0,
            grid=(NT,),
            in_specs=[
                pl.BlockSpec((T, DIM_ZT), lambda n: (0, 0)),       # zt (bf16)
                pl.BlockSpec((DIM_ZT, TN), lambda n: (0, n)),      # w_arec (bf16)
                pl.BlockSpec((1, TN), lambda n: (0, n)),           # b_arec (bf16)
            ],
            out_specs=pl.BlockSpec((T, TN), lambda n: (0, n)),     # arec (bf16)
        ),
        compiler_params=pltpu.CompilerParams(
            # Tiles are independent given zt: lets the 2nd TensorCore on v7x
            # take half of them.  On v5e/v6e (1 TC) this is a no-op.
            dimension_semantics=("parallel",),
            vmem_limit_bytes=vmem_limit,
        ),
        cost_estimate=pl.CostEstimate(
            flops=rec_flops, transcendentals=T * N_pad,
            bytes_accessed=rec_bytes),
    )(zt_bf, w_arec, b_arec)
    arec = arec_pad[:, :N]          # drop the zero-padded columns; stays bf16

    # ---- unpack fused slabs (cheap XLA ops, outside the kernels) -------------
    mu_zt, lv_zt = mu_lv_zt[:, :DIM_ZT], mu_lv_zt[:, DIM_ZT:]
    mu_zi, lv_zi = mu_lv_zi[..., :DIM_ZI], mu_lv_zi[..., DIM_ZI:]
    lv_y = jnp.ones_like(mu_y)                   # constant; never in-kernel

    return {
        "mu_zt": mu_zt, "logvar_zt": lv_zt,
        "mu_p_zt": params["mu_p_zt"], "logvar_p_zt": params["logvar_p_zt"],
        "cates": cates,
        "mu_zi": mu_zi, "logvar_zi": lv_zi, "zi_sample": mu_zi,   # eval mode
        "a_pred": a_pred, "mu_y": mu_y, "logvar_y": lv_y,
        "a_reconstby_zt": arec,     # bf16: halves the largest output stream
    }


# --------------------------- pure-JAX reference ------------------------------
def mtvae_reference(params, input_ins, input_treat):
    # Mirror the kernel's storage quantization so the comparison isolates
    # kernel correctness: treat goes through TREAT_STORE_DTYPE (exact for the
    # binary treatment indicators MTVAE uses), the N-scaled weights and the
    # zt operand of the arec matmul are bf16.
    treat = input_treat.astype(TREAT_STORE_DTYPE).astype(F32)
    q = lambda a: a.astype(BF16).astype(F32)
    w_mu_zt, w_lv_zt = q(params["w_mu_zt"]), q(params["w_lv_zt"])
    w_arec, b_arec = q(params["w_arec"]), q(params["b_arec"])

    mu_zt = treat @ w_mu_zt + params["b_mu_zt"]
    lv_zt = treat @ w_lv_zt + params["b_lv_zt"]
    zt = mu_zt                                            # eval reparameterize
    mu_p = MU_P_WT * params["mu_p_zt"]
    dots = zt @ mu_p.T
    zt_norm = jnp.linalg.norm(zt, axis=1, keepdims=True)
    p_norm = jnp.linalg.norm(mu_p, axis=1, keepdims=True).T
    cos = dots / jnp.maximum(zt_norm * p_norm, COS_EPS)
    qc = jax.nn.softmax(cos * 10.0, axis=1)
    c = jax.nn.softmax(qc, axis=1)
    mu_zi, lv_zi = [], []
    for kk in range(K):
        x_k = input_ins * c[:, kk][None, :]
        mu_zi.append(x_k @ params["w_mu_zi"] + params["b_mu_zi"])
        lv_zi.append(x_k @ params["w_lv_zi"] + params["b_lv_zi"])
    arec = jax.nn.sigmoid(q(zt) @ w_arec + b_arec)
    probs = 0.0
    for kk in range(K):
        probs = probs + jax.nn.sigmoid(mu_zi[kk] @ zt.T) * c[:, kk][None, :]
    zi_all = jnp.concatenate(mu_zi, axis=1)
    a_zt = input_ins @ zt
    rep_w1 = a_zt @ params["w_y1"] + params["b_y1"]
    pred_y2 = zi_all @ params["w_y2"] + params["b_y2"]
    mu_y = jnp.sum(rep_w1 * zi_all, axis=1, keepdims=True) + pred_y2
    return {
        "mu_zt": mu_zt, "logvar_zt": lv_zt, "cates": qc,
        "mu_zi": jnp.stack(mu_zi), "logvar_zi": jnp.stack(lv_zi),
        "a_pred": probs, "mu_y": mu_y, "logvar_y": jnp.ones_like(mu_y),
        "a_reconstby_zt": arec,
    }


# --------------------------------- main --------------------------------------
if __name__ == "__main__":
    B = 4                   # batch of instances
    T = 8                   # num_treatments
    N = 16                  # num_train_samples

    key = jax.random.PRNGKey(0)
    k_ins, k_treat, k_params = jax.random.split(key, 3)
    # binary inputs (adjacency / treatment indicators)
    input_ins = (jax.random.uniform(k_ins, (B, T)) > 0.5).astype(F32)
    input_treat = (jax.random.uniform(k_treat, (T, N)) > 0.5).astype(F32)
    params = make_params(num_train_samples=N, num_treatments=T, key=k_params)

    out = mtvae_forward(params, input_ins, input_treat)
    jax.block_until_ready(out)

    ref = mtvae_reference(params, input_ins, input_treat)
    for name, r in ref.items():
        v = out[name]
        if v.dtype != r.dtype:
            v = v.astype(r.dtype)
        assert v.shape == r.shape, f"shape mismatch in {name}: {v.shape} vs {r.shape}"
        assert jnp.allclose(v, r, atol=5e-2, rtol=5e-2), f"mismatch in {name}"

    print("KERNEL_OK")
</pallas_src>

<mosaic_0001>
module attributes {stable_mosaic.version = 11 : i64} {
  func.func @mtvae_arec_kernel(%arg0: i32, %arg1: memref<8x32xbf16, #tpu.memory_space<vmem>>, %arg2: memref<32x16xbf16, #tpu.memory_space<vmem>>, %arg3: memref<1x16xbf16, #tpu.memory_space<vmem>>, %arg4: memref<8x16xbf16, #tpu.memory_space<vmem>>) attributes {dimension_semantics = [#tpu.dimension_semantics<parallel>], iteration_bounds = array<i64: 1>, scalar_prefetch = 0 : i64, scratch_operands = 0 : i64, tpu.core_type = #tpu.core_type<tc>, window_params = [{pipeline_mode = #tpu.pipeline_mode<synchronous>, transform_indices = @transform_0, window_bounds = array<i64: 8, 32>}, {transform_indices = @transform_1, window_bounds = array<i64: 32, 16>}, {transform_indices = @transform_2, window_bounds = array<i64: 1, 16>}, {transform_indices = @transform_3, window_bounds = array<i64: 8, 16>}]} {
    %c0 = arith.constant 0 : index
    %c0_0 = arith.constant 0 : index
    %0 = vector.load %arg1[%c0, %c0_0] : memref<8x32xbf16, #tpu.memory_space<vmem>>, vector<8x32xbf16>
    %c0_1 = arith.constant 0 : index
    %c0_2 = arith.constant 0 : index
    %1 = vector.load %arg2[%c0_1, %c0_2] : memref<32x16xbf16, #tpu.memory_space<vmem>>, vector<32x16xbf16>
    %cst = arith.constant dense<0.000000e+00> : vector<8x16xf32>
    %2 = tpu.matmul %0, %1, %cst {dimension_numbers = #tpu.dot_dimension_numbers<[1], [0], [0], [1], [0, 0, 1, 1], [], []>} : vector<8x32xbf16>, vector<32x16xbf16>, vector<8x16xf32> -> vector<8x16xf32>
    %c0_3 = arith.constant 0 : index
    %c0_4 = arith.constant 0 : index
    %3 = vector.load %arg3[%c0_3, %c0_4] : memref<1x16xbf16, #tpu.memory_space<vmem>>, vector<1x16xbf16>
    %4 = arith.extf %3 : vector<1x16xbf16> to vector<1x16xf32>
    %5 = vector.broadcast %4 : vector<1x16xf32> to vector<8x16xf32>
    %6 = arith.addf %2, %5 : vector<8x16xf32>
    %7 = arith.negf %6 : vector<8x16xf32>
    %8 = math.exp %7 : vector<8x16xf32>
    %cst_5 = arith.constant 1.000000e+00 : f32
    %9 = vector.broadcast %cst_5 : f32 to vector<8x16xf32>
    %10 = arith.addf %9, %8 : vector<8x16xf32>
    %11 = arith.divf %9, %10 : vector<8x16xf32>
    %12 = arith.truncf %11 : vector<8x16xf32> to vector<8x16xbf16>
    %c0_6 = arith.constant 0 : index
    %c0_7 = arith.constant 0 : index
    %13 = vector.load %arg4[%c0_6, %c0_7] : memref<8x16xbf16, #tpu.memory_space<vmem>>, vector<8x16xbf16>
    tpu.vector_store %arg4[%c0_6, %c0_7], %12 {strides = array<i32>} : memref<8x16xbf16, #tpu.memory_space<vmem>>, vector<8x16xbf16>,
    return
  }
  func.func @transform_0(%arg0: i32) -> (i32, i32) {
    %c0_i32 = arith.constant 0 : i32
    %c0_i32_0 = arith.constant 0 : i32
    %c0_i32_1 = arith.constant 0 : i32
    return %c0_i32, %c0_i32_0 : i32, i32
  }
  func.func @transform_1(%arg0: i32) -> (i32, i32) {
    %c0_i32 = arith.constant 0 : i32
    %c0_i32_0 = arith.constant 0 : i32
    return %c0_i32, %arg0 : i32, i32
  }
  func.func @transform_2(%arg0: i32) -> (i32, i32) {
    %c0_i32 = arith.constant 0 : i32
    %c0_i32_0 = arith.constant 0 : i32
    return %c0_i32, %arg0 : i32, i32
  }
  func.func @transform_3(%arg0: i32) -> (i32, i32) {
    %c0_i32 = arith.constant 0 : i32
    %c0_i32_0 = arith.constant 0 : i32
    return %c0_i32, %arg0 : i32, i32
  }
}

module attributes {stable_mosaic.version = 11 : i64} {
  func.func @mtvae_encode_kernel(%arg0: i32, %arg1: memref<8x16xi8, #tpu.memory_space<vmem>>, %arg2: memref<64x16xbf16, #tpu.memory_space<vmem>>, %arg3: memref<1x64xf32, #tpu.memory_space<vmem>>, %arg4: memref<4x8xf32, #tpu.memory_space<vmem>>, %arg5: memref<8x64xf32, #tpu.memory_space<vmem>>, %arg6: memref<1x64xf32, #tpu.memory_space<vmem>>, %arg7: memref<4x32xf32, #tpu.memory_space<vmem>>, %arg8: memref<32x128xf32, #tpu.memory_space<vmem>>, %arg9: memref<1x128xf32, #tpu.memory_space<vmem>>, %arg10: memref<1x128xf32, #tpu.memory_space<vmem>>, %arg11: memref<1x1xf32, #tpu.memory_space<vmem>>, %arg12: memref<8x64xf32, #tpu.memory_space<vmem>>, %arg13: memref<8x32xbf16, #tpu.memory_space<vmem>>, %arg14: memref<8x4xf32, #tpu.memory_space<vmem>>, %arg15: memref<4x4x64xf32, #tpu.memory_space<vmem>>, %arg16: memref<4x8xf32, #tpu.memory_space<vmem>>, %arg17: memref<4x1xf32, #tpu.memory_space<vmem>>, %arg18: memref<8x64xf32, #tpu.memory_space<vmem>>) attributes {dimension_semantics = [#tpu.dimension_semantics<arbitrary>], iteration_bounds = array<i64: 1>, scalar_prefetch = 0 : i64, scratch_operands = 1 : i64, tpu.core_type = #tpu.core_type<tc>, window_params = [{transform_indices = @transform_0, window_bounds = array<i64: 8, 16>}, {transform_indices = @transform_1, window_bounds = array<i64: 64, 16>}, {pipeline_mode = #tpu.pipeline_mode<synchronous>, transform_indices = @transform_2, window_bounds = array<i64: 1, 64>}, {pipeline_mode = #tpu.pipeline_mode<synchronous>, transform_indices = @transform_3, window_bounds = array<i64: 4, 8>}, {pipeline_mode = #tpu.pipeline_mode<synchronous>, transform_indices = @transform_4, window_bounds = array<i64: 8, 64>}, {pipeline_mode = #tpu.pipeline_mode<synchronous>, transform_indices = @transform_5, window_bounds = array<i64: 1, 64>}, {pipeline_mode = #tpu.pipeline_mode<synchronous>, transform_indices = @transform_6, window_bounds = array<i64: 4, 32>}, {pipeline_mode = #tpu.pipeline_mode<synchronous>, transform_indices = @transform_7, window_bounds = array<i64: 32, 128>}, {pipeline_mode = #tpu.pipeline_mode<synchronous>, transform_indices = @transform_8, window_bounds = array<i64: 1, 128>}, {pipeline_mode = #tpu.pipeline_mode<synchronous>, transform_indices = @transform_9, window_bounds = array<i64: 1, 128>}, {pipeline_mode = #tpu.pipeline_mode<synchronous>, transform_indices = @transform_10, window_bounds = array<i64: 1, 1>}, {pipeline_mode = #tpu.pipeline_mode<synchronous>, transform_indices = @transform_11, window_bounds = array<i64: 8, 64>}, {pipeline_mode = #tpu.pipeline_mode<synchronous>, transform_indices = @transform_12, window_bounds = array<i64: 8, 32>}, {pipeline_mode = #tpu.pipeline_mode<synchronous>, transform_indices = @transform_13, window_bounds = array<i64: 8, 4>}, {pipeline_mode = #tpu.pipeline_mode<synchronous>, transform_indices = @transform_14, window_bounds = array<i64: 4, 4, 64>}, {pipeline_mode = #tpu.pipeline_mode<synchronous>, transform_indices = @transform_15, window_bounds = array<i64: 4, 8>}, {pipeline_mode = #tpu.pipeline_mode<synchronous>, transform_indices = @transform_16, window_bounds = array<i64: 4, 1>}]} {
    %c0_i32 = arith.constant 0 : i32
    %0 = arith.cmpi eq, %arg0, %c0_i32 : i32
    %1 = arith.extui %0 : i1 to i32
    %c0_i32_0 = arith.constant 0 : i32
    %2 = arith.cmpi ne, %1, %c0_i32_0 : i32
    scf.if %2 {
      %cst_10 = arith.constant 0.000000e+00 : f32
      %13 = vector.broadcast %cst_10 : f32 to vector<8x64xf32>
      %c0_11 = arith.constant 0 : index
      %c0_12 = arith.constant 0 : index
      %14 = vector.load %arg18[%c0_11, %c0_12] : memref<8x64xf32, #tpu.memory_space<vmem>>, vector<8x64xf32>
      tpu.vector_store %arg18[%c0_11, %c0_12], %13 {strides = array<i32>} : memref<8x64xf32, #tpu.memory_space<vmem>>, vector<8x64xf32>,
    } else {
    }
    %c0 = arith.constant 0 : index
    %c0_1 = arith.constant 0 : index
    %3 = vector.load %arg18[%c0, %c0_1] : memref<8x64xf32, #tpu.memory_space<vmem>>, vector<8x64xf32>
    %c0_2 = arith.constant 0 : index
    %c0_3 = arith.constant 0 : index
    %4 = vector.load %arg1[%c0_2, %c0_3] : memref<8x16xi8, #tpu.memory_space<vmem>>, vector<8x16xi8>
    %5 = arith.sitofp %4 : vector<8x16xi8> to vector<8x16xbf16>
    %c0_4 = arith.constant 0 : index
    %c0_5 = arith.constant 0 : index
    %6 = vector.load %arg2[%c0_4, %c0_5] : memref<64x16xbf16, #tpu.memory_space<vmem>>, vector<64x16xbf16>
    %cst = arith.constant dense<0.000000e+00> : vector<8x64xf32>
    %7 = tpu.matmul %5, %6, %cst {dimension_numbers = #tpu.dot_dimension_numbers<[1], [1], [0], [0], [0, 0, 1, 0], [], []>} : vector<8x16xbf16>, vector<64x16xbf16>, vector<8x64xf32> -> vector<8x64xf32>
    %8 = arith.addf %3, %7 : vector<8x64xf32>
    %c0_6 = arith.constant 0 : index
    %c0_7 = arith.constant 0 : index
    %9 = vector.load %arg18[%c0_6, %c0_7] : memref<8x64xf32, #tpu.memory_space<vmem>>, vector<8x64xf32>
    tpu.vector_store %arg18[%c0_6, %c0_7], %8 {strides = array<i32>} : memref<8x64xf32, #tpu.memory_space<vmem>>, vector<8x64xf32>,
    %c0_i32_8 = arith.constant 0 : i32
    %10 = arith.cmpi eq, %arg0, %c0_i32_8 : i32
    %11 = arith.extui %10 : i1 to i32
    %c0_i32_9 = arith.constant 0 : i32
    %12 = arith.cmpi ne, %11, %c0_i32_9 : i32
    scf.if %12 {
      %c0_10 = arith.constant 0 : index
      %c0_11 = arith.constant 0 : index
      %13 = vector.load %arg18[%c0_10, %c0_11] : memref<8x64xf32, #tpu.memory_space<vmem>>, vector<8x64xf32>
      %c0_12 = arith.constant 0 : index
      %c0_13 = arith.constant 0 : index
      %14 = vector.load %arg3[%c0_12, %c0_13] : memref<1x64xf32, #tpu.memory_space<vmem>>, vector<1x64xf32>
      %15 = vector.broadcast %14 : vector<1x64xf32> to vector<8x64xf32>
      %16 = arith.addf %13, %15 : vector<8x64xf32>
      %c0_14 = arith.constant 0 : index
      %c0_15 = arith.constant 0 : index
      %17 = vector.load %arg12[%c0_14, %c0_15] : memref<8x64xf32, #tpu.memory_space<vmem>>, vector<8x64xf32>
      tpu.vector_store %arg12[%c0_14, %c0_15], %16 {strides = array<i32>} : memref<8x64xf32, #tpu.memory_space<vmem>>, vector<8x64xf32>,
      %18 = vector.extract_strided_slice %16 {offsets = [0, 0], sizes = [8, 32], strides = [1, 1]} : vector<8x64xf32> to vector<8x32xf32>
      %19 = arith.truncf %18 : vector<8x32xf32> to vector<8x32xbf16>
      %c0_16 = arith.constant 0 : index
      %c0_17 = arith.constant 0 : index
      %20 = vector.load %arg13[%c0_16, %c0_17] : memref<8x32xbf16, #tpu.memory_space<vmem>>, vector<8x32xbf16>
      tpu.vector_store %arg13[%c0_16, %c0_17], %19 {strides = array<i32>} : memref<8x32xbf16, #tpu.memory_space<vmem>>, vector<8x32xbf16>,
      %c0_18 = arith.constant 0 : index
      %c0_19 = arith.constant 0 : index
      %21 = vector.load %arg7[%c0_18, %c0_19] : memref<4x32xf32, #tpu.memory_space<vmem>>, vector<4x32xf32>
      %cst_20 = arith.constant 1.000000e+00 : f32
      %22 = vector.broadcast %cst_20 : f32 to vector<4x32xf32>
      %23 = arith.mulf %22, %21 : vector<4x32xf32>
      %cst_21 = arith.constant dense<0.000000e+00> : vector<8x4xf32>
      %24 = tpu.matmul %18, %23, %cst_21 {dimension_numbers = #tpu.dot_dimension_numbers<[1], [1], [0], [0], [0, 0, 1, 0], [], []>} : vector<8x32xf32>, vector<4x32xf32>, vector<8x4xf32> -> vector<8x4xf32>
      %25 = arith.mulf %18, %18 : vector<8x32xf32>
      %cst_22 = arith.constant dense<0.000000e+00> : vector<8xf32>
      %26 = vector.multi_reduction <add>, %25, %cst_22 [1] : vector<8x32xf32> to vector<8xf32>
      %27 = vector.shape_cast %26 : vector<8xf32> to vector<8x1xf32>
      %28 = arith.mulf %23, %23 : vector<4x32xf32>
      %cst_23 = arith.constant dense<0.000000e+00> : vector<4xf32>
      %29 = vector.multi_reduction <add>, %28, %cst_23 [1] : vector<4x32xf32> to vector<4xf32>
      %30 = vector.shape_cast %29 : vector<4xf32> to vector<4x1xf32>
      %31 = tpu.transpose %30, [1, 0] : vector<4x1xf32> -> vector<1x4xf32>
      %32 = vector.broadcast %27 : vector<8x1xf32> to vector<8x4xf32>
      %33 = vector.broadcast %31 : vector<1x4xf32> to vector<8x4xf32>
      %34 = arith.mulf %32, %33 : vector<8x4xf32>
      %cst_24 = arith.constant 9.99999996E-13 : f32
      %35 = vector.broadcast %cst_24 : f32 to vector<8x4xf32>
      %36 = arith.maximumf %34, %35 : vector<8x4xf32>
      %37 = math.rsqrt %36 : vector<8x4xf32>
      %38 = arith.mulf %24, %37 : vector<8x4xf32>
      %cst_25 = arith.constant 1.000000e+01 : f32
      %39 = vector.broadcast %cst_25 : f32 to vector<8x4xf32>
      %40 = arith.mulf %38, %39 : vector<8x4xf32>
      %cst_26 = arith.constant dense<0xFF800000> : vector<8xf32>
      %41 = vector.multi_reduction <maximumf>, %40, %cst_26 [1] : vector<8x4xf32> to vector<8xf32>
      %42 = vector.shape_cast %41 : vector<8xf32> to vector<8x1xf32>
      %43 = vector.broadcast %42 : vector<8x1xf32> to vector<8x4xf32>
      %44 = arith.subf %40, %43 : vector<8x4xf32>
      %45 = math.exp %44 : vector<8x4xf32>
      %cst_27 = arith.constant dense<0.000000e+00> : vector<8xf32>
      %46 = vector.multi_reduction <add>, %45, %cst_27 [1] : vector<8x4xf32> to vector<8xf32>
      %47 = vector.shape_cast %46 : vector<8xf32> to vector<8x1xf32>
      %48 = vector.broadcast %47 : vector<8x1xf32> to vector<8x4xf32>
      %49 = arith.divf %45, %48 : vector<8x4xf32>
      %c0_28 = arith.constant 0 : index
      %c0_29 = arith.constant 0 : index
      %50 = vector.load %arg14[%c0_28, %c0_29] : memref<8x4xf32, #tpu.memory_space<vmem>>, vector<8x4xf32>
      tpu.vector_store %arg14[%c0_28, %c0_29], %49 {strides = array<i32>} : memref<8x4xf32, #tpu.memory_space<vmem>>, vector<8x4xf32>,
      %cst_30 = arith.constant dense<0xFF800000> : vector<8xf32>
      %51 = vector.multi_reduction <maximumf>, %49, %cst_30 [1] : vector<8x4xf32> to vector<8xf32>
      %52 = vector.shape_cast %51 : vector<8xf32> to vector<8x1xf32>
      %53 = vector.broadcast %52 : vector<8x1xf32> to vector<8x4xf32>
      %54 = arith.subf %49, %53 : vector<8x4xf32>
      %55 = math.exp %54 : vector<8x4xf32>
      %cst_31 = arith.constant dense<0.000000e+00> : vector<8xf32>
      %56 = vector.multi_reduction <add>, %55, %cst_31 [1] : vector<8x4xf32> to vector<8xf32>
      %57 = vector.shape_cast %56 : vector<8xf32> to vector<8x1xf32>
      %58 = vector.broadcast %57 : vector<8x1xf32> to vector<8x4xf32>
      %59 = arith.divf %55, %58 : vector<8x4xf32>
      %60 = tpu.transpose %59, [1, 0] : vector<8x4xf32> -> vector<4x8xf32>
      %c0_32 = arith.constant 0 : index
      %c0_33 = arith.constant 0 : index
      %61 = vector.load %arg4[%c0_32, %c0_33] : memref<4x8xf32, #tpu.memory_space<vmem>>, vector<4x8xf32>
      %c0_34 = arith.constant 0 : index
      %c0_35 = arith.constant 0 : index
      %62 = vector.load %arg5[%c0_34, %c0_35] : memref<8x64xf32, #tpu.memory_space<vmem>>, vector<8x64xf32>
      %c0_36 = arith.constant 0 : index
      %c0_37 = arith.constant 0 : index
      %63 = vector.load %arg6[%c0_36, %c0_37] : memref<1x64xf32, #tpu.memory_space<vmem>>, vector<1x64xf32>
      %cst_38 = arith.constant dense<0.000000e+00> : vector<4x32xf32>
      %64 = tpu.matmul %61, %18, %cst_38 {dimension_numbers = #tpu.dot_dimension_numbers<[1], [0], [0], [1], [0, 0, 1, 1], [], []>} : vector<4x8xf32>, vector<8x32xf32>, vector<4x32xf32> -> vector<4x32xf32>
      %c0_39 = arith.constant 0 : index
      %c0_40 = arith.constant 0 : index
      %65 = vector.load %arg8[%c0_39, %c0_40] : memref<32x128xf32, #tpu.memory_space<vmem>>, vector<32x128xf32>
      %cst_41 = arith.constant dense<0.000000e+00> : vector<4x128xf32>
      %66 = tpu.matmul %64, %65, %cst_41 {dimension_numbers = #tpu.dot_dimension_numbers<[1], [0], [0], [1], [0, 0, 1, 1], [], []>} : vector<4x32xf32>, vector<32x128xf32>, vector<4x128xf32> -> vector<4x128xf32>
      %c0_42 = arith.constant 0 : index
      %c0_43 = arith.constant 0 : index
      %67 = vector.load %arg9[%c0_42, %c0_43] : memref<1x128xf32, #tpu.memory_space<vmem>>, vector<1x128xf32>
      %68 = vector.broadcast %67 : vector<1x128xf32> to vector<4x128xf32>
      %69 = arith.addf %66, %68 : vector<4x128xf32>
      %c0_44 = arith.constant 0 : index
      %c0_45 = arith.constant 0 : index
      %70 = vector.load %arg10[%c0_44, %c0_45] : memref<1x128xf32, #tpu.memory_space<vmem>>, vector<1x128xf32>
      %71 = vector.broadcast %70 : vector<1x128xf32> to vector<4x128xf32>
      %72 = arith.addf %69, %71 : vector<4x128xf32>
      %cst_46 = arith.constant 0.000000e+00 : f32
      %73 = vector.broadcast %cst_46 : f32 to vector<4x8xf32>
      %cst_47 = arith.constant 0.000000e+00 : f32
      %74 = vector.broadcast %cst_47 : f32 to vector<4x1xf32>
      %75 = vector.extract_strided_slice %60 {offsets = [0, 0], sizes = [1, 8], strides = [1, 1]} : vector<4x8xf32> to vector<1x8xf32>
      %76 = vector.broadcast %75 : vector<1x8xf32> to vector<4x8xf32>
      %77 = arith.mulf %61, %76 : vector<4x8xf32>
      %cst_48 = arith.constant dense<0.000000e+00> : vector<4x64xf32>
      %78 = tpu.matmul %77, %62, %cst_48 {dimension_numbers = #tpu.dot_dimension_numbers<[1], [0], [0], [1], [0, 0, 1, 1], [], []>} : vector<4x8xf32>, vector<8x64xf32>, vector<4x64xf32> -> vector<4x64xf32>
      %79 = vector.broadcast %63 : vector<1x64xf32> to vector<4x64xf32>
      %80 = arith.addf %78, %79 : vector<4x64xf32>
      %c0_49 = arith.constant 0 : index
      %c0_50 = arith.constant 0 : index
      %c0_51 = arith.constant 0 : index
      %81 = vector.load %arg15[%c0_49, %c0_50, %c0_51] : memref<4x4x64xf32, #tpu.memory_space<vmem>>, vector<1x4x64xf32>
      %82 = vector.shape_cast %81 : vector<1x4x64xf32> to vector<4x64xf32>
      %83 = vector.shape_cast %80 : vector<4x64xf32> to vector<1x4x64xf32>
      tpu.vector_store %arg15[%c0_49, %c0_50, %c0_51], %83 {strides = array<i32>} : memref<4x4x64xf32, #tpu.memory_space<vmem>>, vector<1x4x64xf32>,
      %84 = vector.extract_strided_slice %80 {offsets = [0, 0], sizes = [4, 32], strides = [1, 1]} : vector<4x64xf32> to vector<4x32xf32>
      %cst_52 = arith.constant dense<0.000000e+00> : vector<4x8xf32>
      %85 = tpu.matmul %84, %18, %cst_52 {dimension_numbers = #tpu.dot_dimension_numbers<[1], [1], [0], [0], [0, 0, 1, 0], [], []>} : vector<4x32xf32>, vector<8x32xf32>, vector<4x8xf32> -> vector<4x8xf32>
      %86 = arith.negf %85 : vector<4x8xf32>
      %87 = math.exp %86 : vector<4x8xf32>
      %cst_53 = arith.constant 1.000000e+00 : f32
      %88 = vector.broadcast %cst_53 : f32 to vector<4x8xf32>
      %89 = arith.addf %88, %87 : vector<4x8xf32>
      %90 = arith.divf %88, %89 : vector<4x8xf32>
      %91 = vector.broadcast %75 : vector<1x8xf32> to vector<4x8xf32>
      %92 = arith.mulf %90, %91 : vector<4x8xf32>
      %93 = arith.addf %73, %92 : vector<4x8xf32>
      %94 = vector.extract_strided_slice %72 {offsets = [0, 0], sizes = [4, 32], strides = [1, 1]} : vector<4x128xf32> to vector<4x32xf32>
      %95 = arith.mulf %84, %94 : vector<4x32xf32>
      %cst_54 = arith.constant dense<0.000000e+00> : vector<4xf32>
      %96 = vector.multi_reduction <add>, %95, %cst_54 [1] : vector<4x32xf32> to vector<4xf32>
      %97 = vector.shape_cast %96 : vector<4xf32> to vector<4x1xf32>
      %98 = arith.addf %74, %97 : vector<4x1xf32>
      %99 = vector.extract_strided_slice %60 {offsets = [1, 0], sizes = [1, 8], strides = [1, 1]} : vector<4x8xf32> to vector<1x8xf32>
      %100 = vector.broadcast %99 : vector<1x8xf32> to vector<4x8xf32>
      %101 = arith.mulf %61, %100 : vector<4x8xf32>
      %cst_55 = arith.constant dense<0.000000e+00> : vector<4x64xf32>
      %102 = tpu.matmul %101, %62, %cst_55 {dimension_numbers = #tpu.dot_dimension_numbers<[1], [0], [0], [1], [0, 0, 1, 1], [], []>} : vector<4x8xf32>, vector<8x64xf32>, vector<4x64xf32> -> vector<4x64xf32>
      %103 = vector.broadcast %63 : vector<1x64xf32> to vector<4x64xf32>
      %104 = arith.addf %102, %103 : vector<4x64xf32>
      %c1 = arith.constant 1 : index
      %c0_56 = arith.constant 0 : index
      %c0_57 = arith.constant 0 : index
      %105 = vector.load %arg15[%c1, %c0_56, %c0_57] : memref<4x4x64xf32, #tpu.memory_space<vmem>>, vector<1x4x64xf32>
      %106 = vector.shape_cast %105 : vector<1x4x64xf32> to vector<4x64xf32>
      %107 = vector.shape_cast %104 : vector<4x64xf32> to vector<1x4x64xf32>
      tpu.vector_store %arg15[%c1, %c0_56, %c0_57], %107 {strides = array<i32>} : memref<4x4x64xf32, #tpu.memory_space<vmem>>, vector<1x4x64xf32>,
      %108 = vector.extract_strided_slice %104 {offsets = [0, 0], sizes = [4, 32], strides = [1, 1]} : vector<4x64xf32> to vector<4x32xf32>
      %cst_58 = arith.constant dense<0.000000e+00> : vector<4x8xf32>
      %109 = tpu.matmul %108, %18, %cst_58 {dimension_numbers = #tpu.dot_dimension_numbers<[1], [1], [0], [0], [0, 0, 1, 0], [], []>} : vector<4x32xf32>, vector<8x32xf32>, vector<4x8xf32> -> vector<4x8xf32>
      %110 = arith.negf %109 : vector<4x8xf32>
      %111 = math.exp %110 : vector<4x8xf32>
      %cst_59 = arith.constant 1.000000e+00 : f32
      %112 = vector.broadcast %cst_59 : f32 to vector<4x8xf32>
      %113 = arith.addf %112, %111 : vector<4x8xf32>
      %114 = arith.divf %112, %113 : vector<4x8xf32>
      %115 = vector.broadcast %99 : vector<1x8xf32> to vector<4x8xf32>
      %116 = arith.mulf %114, %115 : vector<4x8xf32>
      %117 = arith.addf %93, %116 : vector<4x8xf32>
      %118 = vector.extract_strided_slice %72 {offsets = [0, 32], sizes = [4, 32], strides = [1, 1]} : vector<4x128xf32> to vector<4x32xf32>
      %119 = arith.mulf %108, %118 : vector<4x32xf32>
      %cst_60 = arith.constant dense<0.000000e+00> : vector<4xf32>
      %120 = vector.multi_reduction <add>, %119, %cst_60 [1] : vector<4x32xf32> to vector<4xf32>
      %121 = vector.shape_cast %120 : vector<4xf32> to vector<4x1xf32>
      %122 = arith.addf %98, %121 : vector<4x1xf32>
      %123 = vector.extract_strided_slice %60 {offsets = [2, 0], sizes = [1, 8], strides = [1, 1]} : vector<4x8xf32> to vector<1x8xf32>
      %124 = vector.broadcast %123 : vector<1x8xf32> to vector<4x8xf32>
      %125 = arith.mulf %61, %124 : vector<4x8xf32>
      %cst_61 = arith.constant dense<0.000000e+00> : vector<4x64xf32>
      %126 = tpu.matmul %125, %62, %cst_61 {dimension_numbers = #tpu.dot_dimension_numbers<[1], [0], [0], [1], [0, 0, 1, 1], [], []>} : vector<4x8xf32>, vector<8x64xf32>, vector<4x64xf32> -> vector<4x64xf32>
      %127 = vector.broadcast %63 : vector<1x64xf32> to vector<4x64xf32>
      %128 = arith.addf %126, %127 : vector<4x64xf32>
      %c2 = arith.constant 2 : index
      %c0_62 = arith.constant 0 : index
      %c0_63 = arith.constant 0 : index
      %129 = vector.load %arg15[%c2, %c0_62, %c0_63] : memref<4x4x64xf32, #tpu.memory_space<vmem>>, vector<1x4x64xf32>
      %130 = vector.shape_cast %129 : vector<1x4x64xf32> to vector<4x64xf32>
      %131 = vector.shape_cast %128 : vector<4x64xf32> to vector<1x4x64xf32>
      tpu.vector_store %arg15[%c2, %c0_62, %c0_63], %131 {strides = array<i32>} : memref<4x4x64xf32, #tpu.memory_space<vmem>>, vector<1x4x64xf32>,
      %132 = vector.extract_strided_slice %128 {offsets = [0, 0], sizes = [4, 32], strides = [1, 1]} : vector<4x64xf32> to vector<4x32xf32>
      %cst_64 = arith.constant dense<0.000000e+00> : vector<4x8xf32>
      %133 = tpu.matmul %132, %18, %cst_64 {dimension_numbers = #tpu.dot_dimension_numbers<[1], [1], [0], [0], [0, 0, 1, 0], [], []>} : vector<4x32xf32>, vector<8x32xf32>, vector<4x8xf32> -> vector<4x8xf32>
      %134 = arith.negf %133 : vector<4x8xf32>
      %135 = math.exp %134 : vector<4x8xf32>
      %cst_65 = arith.constant 1.000000e+00 : f32
      %136 = vector.broadcast %cst_65 : f32 to vector<4x8xf32>
      %137 = arith.addf %136, %135 : vector<4x8xf32>
      %138 = arith.divf %136, %137 : vector<4x8xf32>
      %139 = vector.broadcast %123 : vector<1x8xf32> to vector<4x8xf32>
      %140 = arith.mulf %138, %139 : vector<4x8xf32>
      %141 = arith.addf %117, %140 : vector<4x8xf32>
      %142 = vector.extract_strided_slice %72 {offsets = [0, 64], sizes = [4, 32], strides = [1, 1]} : vector<4x128xf32> to vector<4x32xf32>
      %143 = arith.mulf %132, %142 : vector<4x32xf32>
      %cst_66 = arith.constant dense<0.000000e+00> : vector<4xf32>
      %144 = vector.multi_reduction <add>, %143, %cst_66 [1] : vector<4x32xf32> to vector<4xf32>
      %145 = vector.shape_cast %144 : vector<4xf32> to vector<4x1xf32>
      %146 = arith.addf %122, %145 : vector<4x1xf32>
      %147 = vector.extract_strided_slice %60 {offsets = [3, 0], sizes = [1, 8], strides = [1, 1]} : vector<4x8xf32> to vector<1x8xf32>
      %148 = vector.broadcast %147 : vector<1x8xf32> to vector<4x8xf32>
      %149 = arith.mulf %61, %148 : vector<4x8xf32>
      %cst_67 = arith.constant dense<0.000000e+00> : vector<4x64xf32>
      %150 = tpu.matmul %149, %62, %cst_67 {dimension_numbers = #tpu.dot_dimension_numbers<[1], [0], [0], [1], [0, 0, 1, 1], [], []>} : vector<4x8xf32>, vector<8x64xf32>, vector<4x64xf32> -> vector<4x64xf32>
      %151 = vector.broadcast %63 : vector<1x64xf32> to vector<4x64xf32>
      %152 = arith.addf %150, %151 : vector<4x64xf32>
      %c3 = arith.constant 3 : index
      %c0_68 = arith.constant 0 : index
      %c0_69 = arith.constant 0 : index
      %153 = vector.load %arg15[%c3, %c0_68, %c0_69] : memref<4x4x64xf32, #tpu.memory_space<vmem>>, vector<1x4x64xf32>
      %154 = vector.shape_cast %153 : vector<1x4x64xf32> to vector<4x64xf32>
      %155 = vector.shape_cast %152 : vector<4x64xf32> to vector<1x4x64xf32>
      tpu.vector_store %arg15[%c3, %c0_68, %c0_69], %155 {strides = array<i32>} : memref<4x4x64xf32, #tpu.memory_space<vmem>>, vector<1x4x64xf32>,
      %156 = vector.extract_strided_slice %152 {offsets = [0, 0], sizes = [4, 32], strides = [1, 1]} : vector<4x64xf32> to vector<4x32xf32>
      %cst_70 = arith.constant dense<0.000000e+00> : vector<4x8xf32>
      %157 = tpu.matmul %156, %18, %cst_70 {dimension_numbers = #tpu.dot_dimension_numbers<[1], [1], [0], [0], [0, 0, 1, 0], [], []>} : vector<4x32xf32>, vector<8x32xf32>, vector<4x8xf32> -> vector<4x8xf32>
      %158 = arith.negf %157 : vector<4x8xf32>
      %159 = math.exp %158 : vector<4x8xf32>
      %cst_71 = arith.constant 1.000000e+00 : f32
      %160 = vector.broadcast %cst_71 : f32 to vector<4x8xf32>
      %161 = arith.addf %160, %159 : vector<4x8xf32>
      %162 = arith.divf %160, %161 : vector<4x8xf32>
      %163 = vector.broadcast %147 : vector<1x8xf32> to vector<4x8xf32>
      %164 = arith.mulf %162, %163 : vector<4x8xf32>
      %165 = arith.addf %141, %164 : vector<4x8xf32>
      %166 = vector.extract_strided_slice %72 {offsets = [0, 96], sizes = [4, 32], strides = [1, 1]} : vector<4x128xf32> to vector<4x32xf32>
      %167 = arith.mulf %156, %166 : vector<4x32xf32>
      %cst_72 = arith.constant dense<0.000000e+00> : vector<4xf32>
      %168 = vector.multi_reduction <add>, %167, %cst_72 [1] : vector<4x32xf32> to vector<4xf32>
      %169 = vector.shape_cast %168 : vector<4xf32> to vector<4x1xf32>
      %170 = arith.addf %146, %169 : vector<4x1xf32>
      %c0_73 = arith.constant 0 : index
      %c0_74 = arith.constant 0 : index
      %171 = vector.load %arg16[%c0_73, %c0_74] : memref<4x8xf32, #tpu.memory_space<vmem>>, vector<4x8xf32>
      tpu.vector_store %arg16[%c0_73, %c0_74], %165 {strides = array<i32>} : memref<4x8xf32, #tpu.memory_space<vmem>>, vector<4x8xf32>,
      %c0_75 = arith.constant 0 : index
      %c0_76 = arith.constant 0 : index
      %172 = vector.load %arg11[%c0_75, %c0_76] : memref<1x1xf32, #tpu.memory_space<vmem>>, vector<1x1xf32>
      %173 = vector.broadcast %172 : vector<1x1xf32> to vector<4x1xf32>
      %174 = arith.addf %170, %173 : vector<4x1xf32>
      %c0_77 = arith.constant 0 : index
      %c0_78 = arith.constant 0 : index
      %175 = vector.load %arg17[%c0_77, %c0_78] : memref<4x1xf32, #tpu.memory_space<vmem>>, vector<4x1xf32>
      tpu.vector_store %arg17[%c0_77, %c0_78], %174 {strides = array<i32>} : memref<4x1xf32, #tpu.memory_space<vmem>>, vector<4x1xf32>,
    } else {
    }
    return
  }
  func.func @transform_0(%arg0: i32) -> (i32, i32) {
    %c0_i32 = arith.constant 0 : i32
    %c0_i32_0 = arith.constant 0 : i32
    return %c0_i32, %arg0 : i32, i32
  }
  func.func @transform_1(%arg0: i32) -> (i32, i32) {
    %c0_i32 = arith.constant 0 : i32
    %c0_i32_0 = arith.constant 0 : i32
    return %c0_i32, %arg0 : i32, i32
  }
  func.func @transform_2(%arg0: i32) -> (i32, i32) {
    %c0_i32 = arith.constant 0 : i32
    %c0_i32_0 = arith.constant 0 : i32
    %c0_i32_1 = arith.constant 0 : i32
    return %c0_i32, %c0_i32_0 : i32, i32
  }
  func.func @transform_3(%arg0: i32) -> (i32, i32) {
    %c0_i32 = arith.constant 0 : i32
    %c0_i32_0 = arith.constant 0 : i32
    %c0_i32_1 = arith.constant 0 : i32
    return %c0_i32, %c0_i32_0 : i32, i32
  }
  func.func @transform_4(%arg0: i32) -> (i32, i32) {
    %c0_i32 = arith.constant 0 : i32
    %c0_i32_0 = arith.constant 0 : i32
    %c0_i32_1 = arith.constant 0 : i32
    return %c0_i32, %c0_i32_0 : i32, i32
  }
  func.func @transform_5(%arg0: i32) -> (i32, i32) {
    %c0_i32 = arith.constant 0 : i32
    %c0_i32_0 = arith.constant 0 : i32
    %c0_i32_1 = arith.constant 0 : i32
    return %c0_i32, %c0_i32_0 : i32, i32
  }
  func.func @transform_6(%arg0: i32) -> (i32, i32) {
    %c0_i32 = arith.constant 0 : i32
    %c0_i32_0 = arith.constant 0 : i32
    %c0_i32_1 = arith.constant 0 : i32
    return %c0_i32, %c0_i32_0 : i32, i32
  }
  func.func @transform_7(%arg0: i32) -> (i32, i32) {
    %c0_i32 = arith.constant 0 : i32
    %c0_i32_0 = arith.constant 0 : i32
    %c0_i32_1 = arith.constant 0 : i32
    return %c0_i32, %c0_i32_0 : i32, i32
  }
  func.func @transform_8(%arg0: i32) -> (i32, i32) {
    %c0_i32 = arith.constant 0 : i32
    %c0_i32_0 = arith.constant 0 : i32
    %c0_i32_1 = arith.constant 0 : i32
    return %c0_i32, %c0_i32_0 : i32, i32
  }
  func.func @transform_9(%arg0: i32) -> (i32, i32) {
    %c0_i32 = arith.constant 0 : i32
    %c0_i32_0 = arith.constant 0 : i32
    %c0_i32_1 = arith.constant 0 : i32
    return %c0_i32, %c0_i32_0 : i32, i32
  }
  func.func @transform_10(%arg0: i32) -> (i32, i32) {
    %c0_i32 = arith.constant 0 : i32
    %c0_i32_0 = arith.constant 0 : i32
    %c0_i32_1 = arith.constant 0 : i32
    return %c0_i32, %c0_i32_0 : i32, i32
  }
  func.func @transform_11(%arg0: i32) -> (i32, i32) {
    %c0_i32 = arith.constant 0 : i32
    %c0_i32_0 = arith.constant 0 : i32
    %c0_i32_1 = arith.constant 0 : i32
    return %c0_i32, %c0_i32_0 : i32, i32
  }
  func.func @transform_12(%arg0: i32) -> (i32, i32) {
    %c0_i32 = arith.constant 0 : i32
    %c0_i32_0 = arith.constant 0 : i32
    %c0_i32_1 = arith.constant 0 : i32
    return %c0_i32, %c0_i32_0 : i32, i32
  }
  func.func @transform_13(%arg0: i32) -> (i32, i32) {
    %c0_i32 = arith.constant 0 : i32
    %c0_i32_0 = arith.constant 0 : i32
    %c0_i32_1 = arith.constant 0 : i32
    return %c0_i32, %c0_i32_0 : i32, i32
  }
  func.func @transform_14(%arg0: i32) -> (i32, i32, i32) {
    %c0_i32 = arith.constant 0 : i32
    %c0_i32_0 = arith.constant 0 : i32
    %c0_i32_1 = arith.constant 0 : i32
    %c0_i32_2 = arith.constant 0 : i32
    return %c0_i32, %c0_i32_0, %c0_i32_1 : i32, i32, i32
  }
  func.func @transform_15(%arg0: i32) -> (i32, i32) {
    %c0_i32 = arith.constant 0 : i32
    %c0_i32_0 = arith.constant 0 : i32
    %c0_i32_1 = arith.constant 0 : i32
    return %c0_i32, %c0_i32_0 : i32, i32
  }
  func.func @transform_16(%arg0: i32) -> (i32, i32) {
    %c0_i32 = arith.constant 0 : i32
    %c0_i32_0 = arith.constant 0 : i32
    %c0_i32_1 = arith.constant 0 : i32
    return %c0_i32, %c0_i32_0 : i32, i32
  }
}

</mosaic_0001>

<llo_original>
// kernel: mtvae_forward.3
$region0: #{mtvae_forward.3}
  #allocation0 [shape = 'u32[]', space=smem, size = 0x4, offset = 0x4, fixed_abs, tag = 'smem constant byte address 0x4 - core index']
  #allocation1 [shape = 'u32[72,128]{1,0:T(1,128)}', space=vmem, size = 0x9000, scoped, tag = 'internal scratch']
  %s0 = inlined_call_operand.vmem [shape: bf16[8,32], index: 0, kind: input, shape index: {}]
  %s1 = inlined_call_operand.vmem [shape: bf16[32,16], index: 1, kind: input, shape index: {}]
  %s2 = inlined_call_operand.vmem [shape: bf16[1,16], index: 2, kind: input, shape index: {}]
  %s3 = inlined_call_operand.hbm [shape: bf16[8,16], index: 3, kind: output, shape index: {}]
  %s4 = sld [smem:[#allocation0]]
  $region22: #{mtvae_forward.3} parent=0
    _
  %s6 = ssub.s32 1, %s4
  %s7 = scalar_select 0, %s6, %s4
  $region1: #{mtvae_forward.3} parent=0
    #allocation2 [shape = 'u8[2048]{0}', space=vmem, size = 0x800, scoped, tag = 'output window, operand 0, single buffered']
    #allocation3 [shape = 's32[1]{0}', space=sflag, size = 0x4, scoped, tag = 'scoped memory for mtvae_forward.3']
    %8 = vsyncpa [#allocation3], 0
    // Predicated region
    $region2: #{mtvae_forward.3} parent=1 // pred_check
      _
    $region3: #{mtvae_forward.3} parent=1 // pred_check_branch
      %10 = sbr.rel (0) target = $region5
    $region4: #{mtvae_forward.3} parent=1 // pred_region
      _
    $region5: #{mtvae_forward.3} parent=1 // pred_fallthru
      _
    // Predicated region
    $region6: #{mtvae_forward.3} parent=1 // pred_check
      _
    $region7: #{mtvae_forward.3} parent=1 // pred_check_branch
      %12 = sbr.rel (0) target = $region9
    $region8: #{mtvae_forward.3} parent=1 // pred_region
      _
    $region9: #{mtvae_forward.3} parent=1 // pred_fallthru
      _
    // Predicated region
    $region10: #{mtvae_forward.3} parent=1 // pred_check
      _
    $region11: #{mtvae_forward.3} parent=1 // pred_check_branch
      %14 = sbr.rel (0) target = $region13
    $region12: #{mtvae_forward.3} parent=1 // pred_region
      _
    $region13: #{mtvae_forward.3} parent=1 // pred_fallthru
      _
    %v16 = vld [vmem:[%s0] sm:$0xf]
    %v17 = vld [vmem:[%s1] sm:$0xf]
    %v18 = vld [vmem:[%s1 + $0x4] sm:$0xf]
    %v19 = vld [vmem:[%s1 + $0x8] sm:$0xf]
    %v20 = vld [vmem:[%s1 + $0xc] sm:$0xf]
    %v21 = vld [vmem:[%s2] sm:$0x1]
    %v22 = vunpack.c.l.bf16 %v21
    %v23 = vperm.slane %v22, 0
    %v28 = vunpack.c.l.b16 %v17
    %v29 = vunpack.c.l.b16 %v18
    %v30 = vunpack.c.l.b16 %v19
    %v31 = vunpack.c.l.b16 %v20
    %v32 = vpack.c.b16 %v29, %v28
    %v33 = vpack.c.b16 %v31, %v30
    %vm36 = vcmask 261120
    %v38 = vsel %vm36, %v16, 0
    %40 = vmatpush.bf16.msra.mxu0 0
    %41 = vmatpush.bf16.msra.mxu0 0
    %42 = vmatpush.bf16.msra.mxu0 0
    %43 = vmatpush.bf16.msra.mxu0 0
    %44 = vmatpush.bf16.msra.mxu0 0
    %45 = vmatpush.bf16.msra.mxu0 0
    %46 = vmatpush.bf16.msra.mxu0 %v33
    %47 = vmatpush.bf16.msra.mxu0 %v32
    %48 = vmatmul.bf16.gmra.mxu0 %v38
    %v49 = vpop.f32.mrf.mxu0
    %v50 = vadd.f32 %v23, %v49
    %v51 = vpop.f32.mrf.mxu0
    %52 = vdwg.mxu0
    %v53 = vxor.u32 %v50, 2147483648
    %v54 = vmul.f32 %v53, 1.442695
    %v55 = vpow.pop %v54
    %v56 = vadd.f32 %v55, 1.0
    %v57 = vrcp.pop %v56
    %v58 = vmul.f32 %v56, %v57
    %v59 = vsub.f32 1.0, %v58
    %v60 = vmul.f32 %v57, %v59
    %v61 = vadd.f32 %v57, %v60
    %vm62 = vweird.f32 %v56
    %vm63 = vweird.f32 %v57
    %vm64 = vmor %vm62, %vm63
    %v65 = vsel %vm64, %v57, %v61
    %v66 = vand.u32 2147483647, %v56
    %vm67 = vcmp.eq.f32.partialorder %v66, 8.507059e+37
    %v68 = vand.u32 %v56, 2147483648
    %v69 = vor.u32 1.1754944e-38, %v68
    %v70 = vsel %vm67, %v69, %v65
    %v71 = vmul.f32 1.0, %v70
    %v72 = vpack.c.bf16 %v71, %v71
    %vm73 = vcmask 125952
    %74 = vst.msk [vmem:[#allocation2] sm:$0xf] %vm73, %v72
    // Predicated region
    $region14: #{mtvae_forward.3} parent=1 // pred_check
      _
    $region15: #{mtvae_forward.3} parent=1 // pred_check_branch
      %76 = sbr.rel (0) target = $region17
    $region16: #{mtvae_forward.3} parent=1 // pred_region
      %78 = vsyncadd [#allocation3], 0
      %s80 = sshll.u32 [#allocation2], 4
      %s81 = int_to_ptr.vmem [resolvable:$true] %s80
      %s82 = sshll.u32 %s3, 4
      %s83 = int_to_ptr.hbm [resolvable:$true] %s82
      %85 = dma.vmem_to_hbm [thread:$0]  %s81, 64, %s83, [#allocation3]
    $region17: #{mtvae_forward.3} parent=1 // pred_fallthru
      _
    // Predicated region
    $region18: #{mtvae_forward.3} parent=1 // pred_check
      _
    $region19: #{mtvae_forward.3} parent=1 // pred_check_branch
      %87 = sbr.rel (0) target = $region21
    $region20: #{mtvae_forward.3} parent=1 // pred_region
      %89 = dma.done [#allocation3], 64
    $region21: #{mtvae_forward.3} parent=1 // pred_fallthru
      _
    %90 = vsyncpa [#allocation3], 1

// kernel: mtvae_forward.2
$region0: #{mtvae_forward.2}
  #allocation0 [shape = 'u32[]', space=smem, size = 0x4, offset = 0x4, fixed_abs, tag = 'smem constant byte address 0x4 - core index']
  #allocation1 [shape = 'u32[72,128]{1,0:T(1,128)}', space=vmem, size = 0x9000, scoped, tag = 'internal scratch']
  #allocation2 [shape = 'f32[8,64]{1,0:T(8,128)}', space=vmem, size = 0x1000, scoped, tag = 'scratch operand']
  #allocation3 [shape = 'f32[1,1]{1,0:T(1,128)S(1)}', space=vmem, size = 0x200, scoped, tag = 'scoped memory for mtvae_forward.2']
  %s0 = inlined_call_operand.vmem [shape: s8[8,16], index: 0, kind: input, shape index: {}]
  %s1 = inlined_call_operand.vmem [shape: bf16[64,16], index: 1, kind: input, shape index: {}]
  %s2 = inlined_call_operand.vmem [shape: f32[1,64], index: 2, kind: input, shape index: {}]
  %s3 = inlined_call_operand.vmem [shape: f32[4,8], index: 3, kind: input, shape index: {}]
  %s4 = inlined_call_operand.vmem [shape: f32[8,64], index: 4, kind: input, shape index: {}]
  %s5 = inlined_call_operand.vmem [shape: f32[1,64], index: 5, kind: input, shape index: {}]
  %s6 = inlined_call_operand.vmem [shape: f32[4,32], index: 6, kind: input, shape index: {}]
  %s7 = inlined_call_operand.vmem [shape: f32[32,128], index: 7, kind: input, shape index: {}]
  %s8 = inlined_call_operand.vmem [shape: f32[1,128], index: 8, kind: input, shape index: {}]
  %s9 = inlined_call_operand.vmem [shape: f32[1,128], index: 9, kind: input, shape index: {}]
  %s10 = inlined_call_operand.<no memory space> [shape: f32[1,1], index: 10, kind: input, shape index: {}]
  %s11 = inlined_call_operand.vmem [shape: f32[8,64], index: 11, kind: output, shape index: {0}]
  %s12 = inlined_call_operand.vmem [shape: bf16[8,32], index: 12, kind: output, shape index: {1}]
  %s13 = inlined_call_operand.vmem [shape: f32[8,4], index: 13, kind: output, shape index: {2}]
  %s14 = inlined_call_operand.vmem [shape: f32[4,4,64], index: 14, kind: output, shape index: {3}]
  %s15 = inlined_call_operand.hbm [shape: f32[4,8], index: 15, kind: output, shape index: {4}]
  %s16 = inlined_call_operand.vmem [shape: f32[4,1], index: 16, kind: output, shape index: {5}]
  %17 = xla_tuple %s11, %s12, %s13, %s14, %s15, %s16
  %s18 = sld [smem:[#allocation0]]
  $region102: #{mtvae_forward.2} parent=0
    _
  %s20 = ssub.s32 1, %s18
  %s21 = scalar_select 0, %s20, %s18
  %v22 = vstv %s10
  %23 = vst [vmem:[#allocation3] sm:$0x1] %v22
  $region1: #{mtvae_forward.2} parent=0
    #allocation4 [shape = 'u8[2048]{0}', space=vmem, size = 0x800, scoped, tag = 'output window, operand 4, single buffered']
    #allocation5 [shape = 's32[1]{0}', space=sflag, size = 0x4, scoped, tag = 'scoped memory for mtvae_forward.2']
    %24 = vsyncpa [#allocation5], 0
    // Predicated region
    $region2: #{mtvae_forward.2} parent=1 // pred_check
      _
    $region3: #{mtvae_forward.2} parent=1 // pred_check_branch
      %26 = sbr.rel (0) target = $region5
    $region4: #{mtvae_forward.2} parent=1 // pred_region
      _
    $region5: #{mtvae_forward.2} parent=1 // pred_fallthru
      _
    // Predicated region
    $region6: #{mtvae_forward.2} parent=1 // pred_check
      _
    $region7: #{mtvae_forward.2} parent=1 // pred_check_branch
      %28 = sbr.rel (0) target = $region9
    $region8: #{mtvae_forward.2} parent=1 // pred_region
      _
    $region9: #{mtvae_forward.2} parent=1 // pred_fallthru
      _
    // Predicated region
    $region10: #{mtvae_forward.2} parent=1 // pred_check
      _
    $region11: #{mtvae_forward.2} parent=1 // pred_check_branch
      %30 = sbr.rel (0) target = $region13
    $region12: #{mtvae_forward.2} parent=1 // pred_region
      _
    $region13: #{mtvae_forward.2} parent=1 // pred_fallthru
      _
    // Predicated region
    $region14: #{mtvae_forward.2} parent=1 // pred_check
      _
    $region15: #{mtvae_forward.2} parent=1 // pred_check_branch
      %32 = sbr.rel (0) target = $region17
    $region16: #{mtvae_forward.2} parent=1 // pred_region
      _
    $region17: #{mtvae_forward.2} parent=1 // pred_fallthru
      _
    // Predicated region
    $region18: #{mtvae_forward.2} parent=1 // pred_check
      _
    $region19: #{mtvae_forward.2} parent=1 // pred_check_branch
      %34 = sbr.rel (0) target = $region21
    $region20: #{mtvae_forward.2} parent=1 // pred_region
      _
    $region21: #{mtvae_forward.2} parent=1 // pred_fallthru
      _
    // Predicated region
    $region22: #{mtvae_forward.2} parent=1 // pred_check
      _
    $region23: #{mtvae_forward.2} parent=1 // pred_check_branch
      %36 = sbr.rel (0) target = $region25
    $region24: #{mtvae_forward.2} parent=1 // pred_region
      _
    $region25: #{mtvae_forward.2} parent=1 // pred_fallthru
      _
    // Predicated region
    $region26: #{mtvae_forward.2} parent=1 // pred_check
      _
    $region27: #{mtvae_forward.2} parent=1 // pred_check_branch
      %38 = sbr.rel (0) target = $region29
    $region28: #{mtvae_forward.2} parent=1 // pred_region
      _
    $region29: #{mtvae_forward.2} parent=1 // pred_fallthru
      _
    // Predicated region
    $region30: #{mtvae_forward.2} parent=1 // pred_check
      _
    $region31: #{mtvae_forward.2} parent=1 // pred_check_branch
      %40 = sbr.rel (0) target = $region33
    $region32: #{mtvae_forward.2} parent=1 // pred_region
      _
    $region33: #{mtvae_forward.2} parent=1 // pred_fallthru
      _
    // Predicated region
    $region34: #{mtvae_forward.2} parent=1 // pred_check
      _
    $region35: #{mtvae_forward.2} parent=1 // pred_check_branch
      %42 = sbr.rel (0) target = $region37
    $region36: #{mtvae_forward.2} parent=1 // pred_region
      _
    $region37: #{mtvae_forward.2} parent=1 // pred_fallthru
      _
    // Predicated region
    $region38: #{mtvae_forward.2} parent=1 // pred_check
      _
    $region39: #{mtvae_forward.2} parent=1 // pred_check_branch
      %44 = sbr.rel (0) target = $region41
    $region40: #{mtvae_forward.2} parent=1 // pred_region
      _
    $region41: #{mtvae_forward.2} parent=1 // pred_fallthru
      _
    // Predicated region
    $region42: #{mtvae_forward.2} parent=1 // pred_check
      _
    $region43: #{mtvae_forward.2} parent=1 // pred_check_branch
      %46 = sbr.rel (0) target = $region45
    $region44: #{mtvae_forward.2} parent=1 // pred_region
      _
    $region45: #{mtvae_forward.2} parent=1 // pred_fallthru
      _
    %p48 = scmp.eq.s32.totalorder 0, 0
    // Predicated region
    $region46: #{mtvae_forward.2} parent=1 // pred_check
      %p49 = pneg %p48
    $region47: #{mtvae_forward.2} parent=1 // pred_check_branch
      %51 = sbr.rel (%p49) target = $region49
    $region48: #{mtvae_forward.2} parent=1 // pred_region
      %vm52 = vcmask 523264
      %53 = vst.msk [vmem:[#allocation2] sm:$0xff] %vm52, 0.0
    $region49: #{mtvae_forward.2} parent=1 // pred_fallthru
      _
    %v54 = vld [vmem:[#allocation2] sm:$0xff]
    %v55 = vld [vmem:[%s0] sm:$0x3]
    %v56 = vunpack.c.0.s8 %v55
    %v57 = vcvt.s32.f32 %v56
    %v58 = vpack.c.bf16 %v57, %v57
    %v59 = vld [vmem:[%s1] sm:$0xf]
    %v60 = vld [vmem:[%s1 + $0x4] sm:$0xf]
    %v61 = vld [vmem:[%s1 + $0x8] sm:$0xf]
    %v62 = vld [vmem:[%s1 + $0xc] sm:$0xf]
    %v63 = vld [vmem:[%s1 + $0x10] sm:$0xf]
    %v64 = vld [vmem:[%s1 + $0x14] sm:$0xf]
    %v65 = vld [vmem:[%s1 + $0x18] sm:$0xf]
    %v66 = vld [vmem:[%s1 + $0x1c] sm:$0xf]
    %v75 = vunpack.c.l.b16 %v59
    %v76 = vunpack.c.l.b16 %v60
    %v77 = vunpack.c.l.b16 %v61
    %v78 = vunpack.c.l.b16 %v62
    %v79 = vunpack.c.l.b16 %v63
    %v80 = vunpack.c.l.b16 %v64
    %v81 = vunpack.c.l.b16 %v65
    %v82 = vunpack.c.l.b16 %v66
    %v83 = vpack.c.b16 %v76, %v75
    %v84 = vpack.c.b16 %v78, %v77
    %v85 = vpack.c.b16 %v80, %v79
    %v86 = vpack.c.b16 %v82, %v81
    %vm87 = vcmask 130048
    %v89 = vsel %vm87, %v58, 0
    %v92 = vsel %vm87, %v83, 0
    %v95 = vsel %vm87, %v84, 0
    %v98 = vsel %vm87, %v85, 0
    %v101 = vsel %vm87, %v86, 0
    %103 = vmatpush.bf16.xpose.msra.mxu0 0
    %104 = vmatpush.bf16.xpose.msra.mxu0 0
    %105 = vmatpush.bf16.xpose.msra.mxu0 0
    %106 = vmatpush.bf16.xpose.msra.mxu0 0
    %107 = vmatpush.bf16.xpose.msra.mxu0 %v101
    %108 = vmatpush.bf16.xpose.msra.mxu0 %v98
    %109 = vmatpush.bf16.xpose.msra.mxu0 %v95
    %110 = vmatpush.bf16.xpose.msra.mxu0 %v92
    %111 = vmatmul.bf16.gmra.mxu0 %v89
    %v112 = vpop.f32.mrf.mxu0
    %v113 = vadd.f32 0.0, %v112
    %v114 = vpop.f32.mrf.mxu0
    %115 = vdwg.mxu0
    %v116 = vadd.f32 %v54, %v113
    %vm117 = vcmask 523264
    %118 = vst.msk [vmem:[#allocation2] sm:$0xff] %vm117, %v116
    // Predicated region
    $region50: #{mtvae_forward.2} parent=1 // pred_check
      %p119 = pneg %p48
    $region51: #{mtvae_forward.2} parent=1 // pred_check_branch
      %121 = sbr.rel (%p119) target = $region53
    $region52: #{mtvae_forward.2} parent=1 // pred_region
      %v122 = vld [vmem:[#allocation2] sm:$0xff]
      %v123 = vld [vmem:[%s2] sm:$0x1]
      %v125 = vperm.slane %v123, 0
      %v127 = vadd.f32 %v122, %v125
      %128 = vst.msk [vmem:[%s11] sm:$0xff] %vm117, %v127
      %v129 = vpack.c.bf16 %v127, %v127
      %vm130 = vcmask 257024
      %131 = vst.msk [vmem:[%s12] sm:$0xf] %vm130, %v129
      %v132 = vld [vmem:[%s6] sm:$0xf]
      %vm133 = vcmask 261120
      %v135 = vsel %vm133, %v127, 0
      %v138 = vsel %vm133, %v132, 0
      %140 = vmatpush.xpose.msra.mxu0 0.0
      %141 = vmatpush.xpose.msra.mxu0 0.0
      %142 = vmatpush.xpose.msra.mxu0 0.0
      %143 = vmatpush.xpose.msra.mxu0 0.0
      %144 = vmatpush.xpose.msra.mxu0 0.0
      %145 = vmatpush.xpose.msra.mxu0 0.0
      %146 = vmatpush.xpose.msra.mxu0 0.0
      %147 = vmatpush.xpose.msra.mxu0 0.0
      %148 = vmatpush.xpose.msra.mxu0 0.0
      %149 = vmatpush.xpose.msra.mxu0 0.0
      %150 = vmatpush.xpose.msra.mxu0 0.0
      %151 = vmatpush.xpose.msra.mxu0 0.0
      %152 = vmatpush.xpose.msra.mxu0 0.0
      %153 = vmatpush.xpose.msra.mxu0 0.0
      %154 = vmatpush.xpose.msra.mxu0 0.0
      %155 = vmatpush.xpose.msra.mxu0 %v138
      %156 = vmatmul.f32.gmra.mxu0 %v135
      %v157 = vpop.f32.mrf.mxu0
      %v158 = vadd.f32 0.0, %v157
      %159 = vdwg.mxu0
      %v160 = vmul.f32 %v127, %v127
      %v161 = vsel %vm133, %v160, 0.0
      %162 = vadd.xlane.f32.xlu0 %v161
      %v163 = vpop.xlane.xlu0 %162
      %v164 = vmul.f32 %v132, %v132
      %v165 = vsel %vm130, %v164, 0.0
      %166 = vadd.xlane.f32.xlu0 %v165
      %v167 = vpop.xlane.xlu0 %166
      %168 = vxpose.xlu0.b32.start [1/16] %v167, 128
      %169 = vxpose.xlu0.b32.cont [2/16] 0.0, 128
      %170 = vxpose.xlu0.b32.cont [3/16] 0.0, 128
      %171 = vxpose.xlu0.b32.cont [4/16] 0.0, 128
      %172 = vxpose.xlu0.b32.cont [5/16] 0.0, 128
      %173 = vxpose.xlu0.b32.cont [6/16] 0.0, 128
      %174 = vxpose.xlu0.b32.cont [7/16] 0.0, 128
      %175 = vxpose.xlu0.b32.cont [8/16] 0.0, 128
      %176 = vxpose.xlu0.b32.cont [9/16] 0.0, 128
      %177 = vxpose.xlu0.b32.cont [10/16] 0.0, 128
      %178 = vxpose.xlu0.b32.cont [11/16] 0.0, 128
      %179 = vxpose.xlu0.b32.cont [12/16] 0.0, 128
      %180 = vxpose.xlu0.b32.cont [13/16] 0.0, 128
      %181 = vxpose.xlu0.b32.cont [14/16] 0.0, 128
      %182 = vxpose.xlu0.b32.cont [15/16] 0.0, 128
      %183 = vxpose.xlu0.b32.end [16/16] 0.0, 128
      %v184 = vpop.trf.xlu0
      %v185 = vpop.trf.xlu0
      %v186 = vpop.trf.xlu0
      %v187 = vpop.trf.xlu0
      %v188 = vpop.trf.xlu0
      %v189 = vpop.trf.xlu0
      %v190 = vpop.trf.xlu0
      %v191 = vpop.trf.xlu0
      %v192 = vpop.trf.xlu0
      %v193 = vpop.trf.xlu0
      %v194 = vpop.trf.xlu0
      %v195 = vpop.trf.xlu0
      %v196 = vpop.trf.xlu0
      %v197 = vpop.trf.xlu0
      %v198 = vpop.trf.xlu0
      %v199 = vpop.trf.xlu0
      %v200 = vperm.slane %v184, 0
      %v201 = vmul.f32 %v163, %v200
      %v202 = vmax.f32 %v201, 1e-12
      %v203 = vrsqrt.pop %v202
      %v204 = vmul.f32 %v203, %v202
      %v205 = vmul.f32 %v204, %v203
      %v206 = vmul.f32 0.5, %v205
      %v207 = vsub.f32 1.5, %v206
      %v208 = vmul.f32 %v203, %v207
      %vm209 = vweird.f32 %v202
      %vm210 = vweird.f32 %v203
      %vm211 = vmor %vm209, %vm210
      %v212 = vsel %vm211, %v203, %v208
      %v213 = vmul.f32 %v158, %v212
      %v214 = vmul.f32 %v213, 10.0
      %vm215 = vcmask 31744
      %v216 = vsel %vm215, %v214, -inf
      %217 = vmax.xlane.f32.xlu0 %v216
      %v218 = vpop.xlane.xlu0 %217
      %v219 = vsub.f32 %v214, %v218
      %v220 = vmul.f32 %v219, 1.442695
      %v221 = vpow.pop %v220
      %v222 = vsel %vm215, %v221, 0.0
      %223 = vadd.xlane.f32.xlu0 %v222
      %v224 = vpop.xlane.xlu0 %223
      %v225 = vrcp.pop %v224
      %v226 = vmul.f32 %v224, %v225
      %v227 = vsub.f32 1.0, %v226
      %v228 = vmul.f32 %v225, %v227
      %v229 = vadd.f32 %v225, %v228
      %vm230 = vweird.f32 %v224
      %vm231 = vweird.f32 %v225
      %vm232 = vmor %vm230, %vm231
      %v233 = vsel %vm232, %v225, %v229
      %v234 = vand.u32 2147483647, %v224
      %vm235 = vcmp.eq.f32.partialorder %v234, 8.507059e+37
      %v236 = vand.u32 %v224, 2147483648
      %v237 = vor.u32 1.1754944e-38, %v236
      %v238 = vsel %vm235, %v237, %v233
      %v239 = vmul.f32 %v221, %v238
      %240 = vst.msk [vmem:[%s13] sm:$0xff] %vm215, %v239
      %v241 = vsel %vm215, %v239, -inf
      %242 = vmax.xlane.f32.xlu0 %v241
      %v243 = vpop.xlane.xlu0 %242
      %v244 = vsub.f32 %v239, %v243
      %v245 = vmul.f32 %v244, 1.442695
      %v246 = vpow.pop %v245
      %v247 = vsel %vm215, %v246, 0.0
      %248 = vadd.xlane.f32.xlu0 %v247
      %v249 = vpop.xlane.xlu0 %248
      %v250 = vrcp.pop %v249
      %v251 = vmul.f32 %v249, %v250
      %v252 = vsub.f32 1.0, %v251
      %v253 = vmul.f32 %v250, %v252
      %v254 = vadd.f32 %v250, %v253
      %vm255 = vweird.f32 %v249
      %vm256 = vweird.f32 %v250
      %vm257 = vmor %vm255, %vm256
      %v258 = vsel %vm257, %v250, %v254
      %v259 = vand.u32 2147483647, %v249
      %vm260 = vcmp.eq.f32.partialorder %v259, 8.507059e+37
      %v261 = vand.u32 %v249, 2147483648
      %v262 = vor.u32 1.1754944e-38, %v261
      %v263 = vsel %vm260, %v262, %v258
      %v264 = vmul.f32 %v246, %v263
      %265 = vxpose.xlu0.b32.start [1/16] %v264, 128
      %266 = vxpose.xlu0.b32.cont [2/16] 0.0, 128
      %267 = vxpose.xlu0.b32.cont [3/16] 0.0, 128
      %268 = vxpose.xlu0.b32.cont [4/16] 0.0, 128
      %269 = vxpose.xlu0.b32.cont [5/16] 0.0, 128
      %270 = vxpose.xlu0.b32.cont [6/16] 0.0, 128
      %271 = vxpose.xlu0.b32.cont [7/16] 0.0, 128
      %272 = vxpose.xlu0.b32.cont [8/16] 0.0, 128
      %273 = vxpose.xlu0.b32.cont [9/16] 0.0, 128
      %274 = vxpose.xlu0.b32.cont [10/16] 0.0, 128
      %275 = vxpose.xlu0.b32.cont [11/16] 0.0, 128
      %276 = vxpose.xlu0.b32.cont [12/16] 0.0, 128
      %277 = vxpose.xlu0.b32.cont [13/16] 0.0, 128
      %278 = vxpose.xlu0.b32.cont [14/16] 0.0, 128
      %279 = vxpose.xlu0.b32.cont [15/16] 0.0, 128
      %280 = vxpose.xlu0.b32.end [16/16] 0.0, 128
      %v281 = vpop.trf.xlu0
      %v282 = vpop.trf.xlu0
      %v283 = vpop.trf.xlu0
      %v284 = vpop.trf.xlu0
      %v285 = vpop.trf.xlu0
      %v286 = vpop.trf.xlu0
      %v287 = vpop.trf.xlu0
      %v288 = vpop.trf.xlu0
      %v289 = vpop.trf.xlu0
      %v290 = vpop.trf.xlu0
      %v291 = vpop.trf.xlu0
      %v292 = vpop.trf.xlu0
      %v293 = vpop.trf.xlu0
      %v294 = vpop.trf.xlu0
      %v295 = vpop.trf.xlu0
      %v296 = vpop.trf.xlu0
      %v297 = vld [vmem:[%s3] sm:$0xf]
      %v298 = vld [vmem:[%s4] sm:$0xff]
      %v299 = vld [vmem:[%s5] sm:$0x1]
      %vm300 = vcmask 64512
      %v302 = vsel %vm300, %v297, 0
      %304 = vmatpush.msra.mxu0 0.0
      %305 = vmatpush.msra.mxu0 0.0
      %306 = vmatpush.msra.mxu0 0.0
      %307 = vmatpush.msra.mxu0 0.0
      %308 = vmatpush.msra.mxu0 0.0
      %309 = vmatpush.msra.mxu0 0.0
      %310 = vmatpush.msra.mxu0 0.0
      %311 = vmatpush.msra.mxu0 0.0
      %312 = vmatpush.msra.mxu0 0.0
      %313 = vmatpush.msra.mxu0 0.0
      %314 = vmatpush.msra.mxu0 0.0
      %315 = vmatpush.msra.mxu0 0.0
      %316 = vmatpush.msra.mxu0 0.0
      %317 = vmatpush.msra.mxu0 0.0
      %318 = vmatpush.msra.mxu0 0.0
      %319 = vmatpush.msra.mxu0 %v127
      %320 = vmatmul.f32.gmra.mxu0 %v302
      %v321 = vpop.f32.mrf.mxu0
      %v322 = vadd.f32 0.0, %v321
      %323 = vdwg.mxu0
      %v324 = vld [vmem:[%s7] sm:$0xff]
      %v325 = vld [vmem:[%s7 + $0x8] sm:$0xff]
      %v326 = vld [vmem:[%s7 + $0x10] sm:$0xff]
      %v327 = vld [vmem:[%s7 + $0x18] sm:$0xff]
      %v328 = vld [vmem:[%s8] sm:$0x1]
      %v330 = vperm.slane %v328, 0
      %v333 = vsel %vm133, %v322, 0
      %335 = vmatpush.msra.mxu0 0.0
      %336 = vmatpush.msra.mxu0 0.0
      %337 = vmatpush.msra.mxu0 0.0
      %338 = vmatpush.msra.mxu0 0.0
      %339 = vmatpush.msra.mxu0 0.0
      %340 = vmatpush.msra.mxu0 0.0
      %341 = vmatpush.msra.mxu0 0.0
      %342 = vmatpush.msra.mxu0 0.0
      %343 = vmatpush.msra.mxu0 0.0
      %344 = vmatpush.msra.mxu0 0.0
      %345 = vmatpush.msra.mxu0 0.0
      %346 = vmatpush.msra.mxu0 0.0
      %347 = vmatpush.msra.mxu0 %v327
      %348 = vmatpush.msra.mxu0 %v326
      %349 = vmatpush.msra.mxu0 %v325
      %350 = vmatpush.msra.mxu0 %v324
      %351 = vmatmul.f32.gmra.mxu0 %v333
      %v352 = vpop.f32.mrf.mxu0
      %v353 = vadd.f32 %v330, %v352
      %354 = vdwg.mxu0
      %v355 = vld [vmem:[%s9] sm:$0x1]
      %v357 = vperm.slane %v355, 0
      %v359 = vadd.f32 %v353, %v357
      %v360 = vperm.slane %v281, 0
      %v361 = vmul.f32 %v297, %v360
      %v363 = vperm.slane %v299, 0
      %v366 = vsel %vm300, %v361, 0
      %368 = vmatpush.msra.mxu0 0.0
      %369 = vmatpush.msra.mxu0 0.0
      %370 = vmatpush.msra.mxu0 0.0
      %371 = vmatpush.msra.mxu0 0.0
      %372 = vmatpush.msra.mxu0 0.0
      %373 = vmatpush.msra.mxu0 0.0
      %374 = vmatpush.msra.mxu0 0.0
      %375 = vmatpush.msra.mxu0 0.0
      %376 = vmatpush.msra.mxu0 0.0
      %377 = vmatpush.msra.mxu0 0.0
      %378 = vmatpush.msra.mxu0 0.0
      %379 = vmatpush.msra.mxu0 0.0
      %380 = vmatpush.msra.mxu0 0.0
      %381 = vmatpush.msra.mxu0 0.0
      %382 = vmatpush.msra.mxu0 0.0
      %383 = vmatpush.msra.mxu0 %v298
      %384 = vmatmul.f32.gmra.mxu0 %v366
      %v385 = vpop.f32.mrf.mxu0
      %v386 = vadd.f32 %v363, %v385
      %387 = vdwg.mxu0
      %vm388 = vcmask 519168
      %389 = vst.msk [vmem:[%s14] sm:$0xf] %vm388, %v386
      %v391 = vsel %vm133, %v386, 0
      %393 = vmatpush.xpose.msra.mxu0 0.0
      %394 = vmatpush.xpose.msra.mxu0 0.0
      %395 = vmatpush.xpose.msra.mxu0 0.0
      %396 = vmatpush.xpose.msra.mxu0 0.0
      %397 = vmatpush.xpose.msra.mxu0 0.0
      %398 = vmatpush.xpose.msra.mxu0 0.0
      %399 = vmatpush.xpose.msra.mxu0 0.0
      %400 = vmatpush.xpose.msra.mxu0 0.0
      %401 = vmatpush.xpose.msra.mxu0 0.0
      %402 = vmatpush.xpose.msra.mxu0 0.0
      %403 = vmatpush.xpose.msra.mxu0 0.0
      %404 = vmatpush.xpose.msra.mxu0 0.0
      %405 = vmatpush.xpose.msra.mxu0 0.0
      %406 = vmatpush.xpose.msra.mxu0 0.0
      %407 = vmatpush.xpose.msra.mxu0 0.0
      %408 = vmatpush.xpose.msra.mxu0 %v135
      %409 = vmatmul.f32.gmra.mxu0 %v391
      %v410 = vpop.f32.mrf.mxu0
      %v411 = vadd.f32 0.0, %v410
      %412 = vdwg.mxu0
      %v413 = vxor.u32 %v411, 2147483648
      %v414 = vmul.f32 %v413, 1.442695
      %v415 = vpow.pop %v414
      %v416 = vadd.f32 %v415, 1.0
      %v417 = vrcp.pop %v416
      %v418 = vmul.f32 %v416, %v417
      %v419 = vsub.f32 1.0, %v418
      %v420 = vmul.f32 %v417, %v419
      %v421 = vadd.f32 %v417, %v420
      %vm422 = vweird.f32 %v416
      %vm423 = vweird.f32 %v417
      %vm424 = vmor %vm422, %vm423
      %v425 = vsel %vm424, %v417, %v421
      %v426 = vand.u32 2147483647, %v416
      %vm427 = vcmp.eq.f32.partialorder %v426, 8.507059e+37
      %v428 = vand.u32 %v416, 2147483648
      %v429 = vor.u32 1.1754944e-38, %v428
      %v430 = vsel %vm427, %v429, %v425
      %v431 = vmul.f32 1.0, %v430
      %v432 = vmul.f32 %v431, %v360
      %v433 = vadd.f32 %v432, 0.0
      %v434 = vmul.f32 %v386, %v359
      %v435 = vsel %vm130, %v434, 0.0
      %436 = vadd.xlane.f32.xlu0 %v435
      %v437 = vpop.xlane.xlu0 %436
      %v438 = vadd.f32 %v437, 0.0
      %v439 = vperm.slane %v281, 1
      %v440 = vmul.f32 %v297, %v439
      %v442 = vsel %vm300, %v440, 0
      %444 = vmatpush.msra.mxu0 0.0
      %445 = vmatpush.msra.mxu0 0.0
      %446 = vmatpush.msra.mxu0 0.0
      %447 = vmatpush.msra.mxu0 0.0
      %448 = vmatpush.msra.mxu0 0.0
      %449 = vmatpush.msra.mxu0 0.0
      %450 = vmatpush.msra.mxu0 0.0
      %451 = vmatpush.msra.mxu0 0.0
      %452 = vmatpush.msra.mxu0 0.0
      %453 = vmatpush.msra.mxu0 0.0
      %454 = vmatpush.msra.mxu0 0.0
      %455 = vmatpush.msra.mxu0 0.0
      %456 = vmatpush.msra.mxu0 0.0
      %457 = vmatpush.msra.mxu0 0.0
      %458 = vmatpush.msra.mxu0 0.0
      %459 = vmatpush.msra.mxu0 %v298
      %460 = vmatmul.f32.gmra.mxu0 %v442
      %v461 = vpop.f32.mrf.mxu0
      %v462 = vadd.f32 %v363, %v461
      %463 = vdwg.mxu0
      %s464 = scalar_lea.vmem %s14, 4
      %465 = vst.msk [vmem:[%s464] sm:$0xf] %vm388, %v462
      %v467 = vsel %vm133, %v462, 0
      %469 = vmatpush.xpose.msra.mxu0 0.0
      %470 = vmatpush.xpose.msra.mxu0 0.0
      %471 = vmatpush.xpose.msra.mxu0 0.0
      %472 = vmatpush.xpose.msra.mxu0 0.0
      %473 = vmatpush.xpose.msra.mxu0 0.0
      %474 = vmatpush.xpose.msra.mxu0 0.0
      %475 = vmatpush.xpose.msra.mxu0 0.0
      %476 = vmatpush.xpose.msra.mxu0 0.0
      %477 = vmatpush.xpose.msra.mxu0 0.0
      %478 = vmatpush.xpose.msra.mxu0 0.0
      %479 = vmatpush.xpose.msra.mxu0 0.0
      %480 = vmatpush.xpose.msra.mxu0 0.0
      %481 = vmatpush.xpose.msra.mxu0 0.0
      %482 = vmatpush.xpose.msra.mxu0 0.0
      %483 = vmatpush.xpose.msra.mxu0 0.0
      %484 = vmatpush.xpose.msra.mxu0 %v135
      %485 = vmatmul.f32.gmra.mxu0 %v467
      %v486 = vpop.f32.mrf.mxu0
      %v487 = vadd.f32 0.0, %v486
      %488 = vdwg.mxu0
      %v489 = vxor.u32 %v487, 2147483648
      %v490 = vmul.f32 %v489, 1.442695
      %v491 = vpow.pop %v490
      %v492 = vadd.f32 %v491, 1.0
      %v493 = vrcp.pop %v492
      %v494 = vmul.f32 %v492, %v493
      %v495 = vsub.f32 1.0, %v494
      %v496 = vmul.f32 %v493, %v495
      %v497 = vadd.f32 %v493, %v496
      %vm498 = vweird.f32 %v492
      %vm499 = vweird.f32 %v493
      %vm500 = vmor %vm498, %vm499
      %v501 = vsel %vm500, %v493, %v497
      %v502 = vand.u32 2147483647, %v492
      %vm503 = vcmp.eq.f32.partialorder %v502, 8.507059e+37
      %v504 = vand.u32 %v492, 2147483648
      %v505 = vor.u32 1.1754944e-38, %v504
      %v506 = vsel %vm503, %v505, %v501
      %v507 = vmul.f32 1.0, %v506
      %v508 = vmul.f32 %v507, %v439
      %v509 = vadd.f32 %v433, %v508
      %511 = vrot.lane.b32.xlu0 %v359, 96
      %v512 = vpop.permute.xlu0 %511
      %v514 = vmul.f32 %v462, %v512
      %v515 = vsel %vm130, %v514, 0.0
      %516 = vadd.xlane.f32.xlu0 %v515
      %v517 = vpop.xlane.xlu0 %516
      %v518 = vadd.f32 %v438, %v517
      %v519 = vperm.slane %v281, 2
      %v520 = vmul.f32 %v297, %v519
      %v522 = vsel %vm300, %v520, 0
      %524 = vmatpush.msra.mxu0 0.0
      %525 = vmatpush.msra.mxu0 0.0
      %526 = vmatpush.msra.mxu0 0.0
      %527 = vmatpush.msra.mxu0 0.0
      %528 = vmatpush.msra.mxu0 0.0
      %529 = vmatpush.msra.mxu0 0.0
      %530 = vmatpush.msra.mxu0 0.0
      %531 = vmatpush.msra.mxu0 0.0
      %532 = vmatpush.msra.mxu0 0.0
      %533 = vmatpush.msra.mxu0 0.0
      %534 = vmatpush.msra.mxu0 0.0
      %535 = vmatpush.msra.mxu0 0.0
      %536 = vmatpush.msra.mxu0 0.0
      %537 = vmatpush.msra.mxu0 0.0
      %538 = vmatpush.msra.mxu0 0.0
      %539 = vmatpush.msra.mxu0 %v298
      %540 = vmatmul.f32.gmra.mxu0 %v522
      %v541 = vpop.f32.mrf.mxu0
      %v542 = vadd.f32 %v363, %v541
      %543 = vdwg.mxu0
      %s544 = scalar_lea.vmem %s14, 8
      %545 = vst.msk [vmem:[%s544] sm:$0xf] %vm388, %v542
      %v547 = vsel %vm133, %v542, 0
      %549 = vmatpush.xpose.msra.mxu0 0.0
      %550 = vmatpush.xpose.msra.mxu0 0.0
      %551 = vmatpush.xpose.msra.mxu0 0.0
      %552 = vmatpush.xpose.msra.mxu0 0.0
      %553 = vmatpush.xpose.msra.mxu0 0.0
      %554 = vmatpush.xpose.msra.mxu0 0.0
      %555 = vmatpush.xpose.msra.mxu0 0.0
      %556 = vmatpush.xpose.msra.mxu0 0.0
      %557 = vmatpush.xpose.msra.mxu0 0.0
      %558 = vmatpush.xpose.msra.mxu0 0.0
      %559 = vmatpush.xpose.msra.mxu0 0.0
      %560 = vmatpush.xpose.msra.mxu0 0.0
      %561 = vmatpush.xpose.msra.mxu0 0.0
      %562 = vmatpush.xpose.msra.mxu0 0.0
      %563 = vmatpush.xpose.msra.mxu0 0.0
      %564 = vmatpush.xpose.msra.mxu0 %v135
      %565 = vmatmul.f32.gmra.mxu0 %v547
      %v566 = vpop.f32.mrf.mxu0
      %v567 = vadd.f32 0.0, %v566
      %568 = vdwg.mxu0
      %v569 = vxor.u32 %v567, 2147483648
      %v570 = vmul.f32 %v569, 1.442695
      %v571 = vpow.pop %v570
      %v572 = vadd.f32 %v571, 1.0
      %v573 = vrcp.pop %v572
      %v574 = vmul.f32 %v572, %v573
      %v575 = vsub.f32 1.0, %v574
      %v576 = vmul.f32 %v573, %v575
      %v577 = vadd.f32 %v573, %v576
      %vm578 = vweird.f32 %v572
      %vm579 = vweird.f32 %v573
      %vm580 = vmor %vm578, %vm579
      %v581 = vsel %vm580, %v573, %v577
      %v582 = vand.u32 2147483647, %v572
      %vm583 = vcmp.eq.f32.partialorder %v582, 8.507059e+37
      %v584 = vand.u32 %v572, 2147483648
      %v585 = vor.u32 1.1754944e-38, %v584
      %v586 = vsel %vm583, %v585, %v581
      %v587 = vmul.f32 1.0, %v586
      %v588 = vmul.f32 %v587, %v519
      %v589 = vadd.f32 %v509, %v588
      %590 = vrot.lane.b32.xlu0 %v359, 64
      %v591 = vpop.permute.xlu0 %590
      %v593 = vmul.f32 %v542, %v591
      %v594 = vsel %vm130, %v593, 0.0
      %595 = vadd.xlane.f32.xlu0 %v594
      %v596 = vpop.xlane.xlu0 %595
      %v597 = vadd.f32 %v518, %v596
      %v598 = vperm.slane %v281, 3
      %v599 = vmul.f32 %v297, %v598
      %v601 = vsel %vm300, %v599, 0
      %603 = vmatpush.msra.mxu0 0.0
      %604 = vmatpush.msra.mxu0 0.0
      %605 = vmatpush.msra.mxu0 0.0
      %606 = vmatpush.msra.mxu0 0.0
      %607 = vmatpush.msra.mxu0 0.0
      %608 = vmatpush.msra.mxu0 0.0
      %609 = vmatpush.msra.mxu0 0.0
      %610 = vmatpush.msra.mxu0 0.0
      %611 = vmatpush.msra.mxu0 0.0
      %612 = vmatpush.msra.mxu0 0.0
      %613 = vmatpush.msra.mxu0 0.0
      %614 = vmatpush.msra.mxu0 0.0
      %615 = vmatpush.msra.mxu0 0.0
      %616 = vmatpush.msra.mxu0 0.0
      %617 = vmatpush.msra.mxu0 0.0
      %618 = vmatpush.msra.mxu0 %v298
      %619 = vmatmul.f32.gmra.mxu0 %v601
      %v620 = vpop.f32.mrf.mxu0
      %v621 = vadd.f32 %v363, %v620
      %622 = vdwg.mxu0
      %s623 = scalar_lea.vmem %s14, 12
      %624 = vst.msk [vmem:[%s623] sm:$0xf] %vm388, %v621
      %v626 = vsel %vm133, %v621, 0
      %628 = vmatpush.xpose.msra.mxu0 0.0
      %629 = vmatpush.xpose.msra.mxu0 0.0
      %630 = vmatpush.xpose.msra.mxu0 0.0
      %631 = vmatpush.xpose.msra.mxu0 0.0
      %632 = vmatpush.xpose.msra.mxu0 0.0
      %633 = vmatpush.xpose.msra.mxu0 0.0
      %634 = vmatpush.xpose.msra.mxu0 0.0
      %635 = vmatpush.xpose.msra.mxu0 0.0
      %636 = vmatpush.xpose.msra.mxu0 0.0
      %637 = vmatpush.xpose.msra.mxu0 0.0
      %638 = vmatpush.xpose.msra.mxu0 0.0
      %639 = vmatpush.xpose.msra.mxu0 0.0
      %640 = vmatpush.xpose.msra.mxu0 0.0
      %641 = vmatpush.xpose.msra.mxu0 0.0
      %642 = vmatpush.xpose.msra.mxu0 0.0
      %643 = vmatpush.xpose.msra.mxu0 %v135
      %644 = vmatmul.f32.gmra.mxu0 %v626
      %v645 = vpop.f32.mrf.mxu0
      %v646 = vadd.f32 0.0, %v645
      %647 = vdwg.mxu0
      %v648 = vxor.u32 %v646, 2147483648
      %v649 = vmul.f32 %v648, 1.442695
      %v650 = vpow.pop %v649
      %v651 = vadd.f32 %v650, 1.0
      %v652 = vrcp.pop %v651
      %v653 = vmul.f32 %v651, %v652
      %v654 = vsub.f32 1.0, %v653
      %v655 = vmul.f32 %v652, %v654
      %v656 = vadd.f32 %v652, %v655
      %vm657 = vweird.f32 %v651
      %vm658 = vweird.f32 %v652
      %vm659 = vmor %vm657, %vm658
      %v660 = vsel %vm659, %v652, %v656
      %v661 = vand.u32 2147483647, %v651
      %vm662 = vcmp.eq.f32.partialorder %v661, 8.507059e+37
      %v663 = vand.u32 %v651, 2147483648
      %v664 = vor.u32 1.1754944e-38, %v663
      %v665 = vsel %vm662, %v664, %v660
      %v666 = vmul.f32 1.0, %v665
      %v667 = vmul.f32 %v666, %v598
      %v668 = vadd.f32 %v589, %v667
      %669 = vrot.lane.b32.xlu0 %v359, 32
      %v670 = vpop.permute.xlu0 %669
      %v672 = vmul.f32 %v621, %v670
      %v673 = vsel %vm130, %v672, 0.0
      %674 = vadd.xlane.f32.xlu0 %v673
      %v675 = vpop.xlane.xlu0 %674
      %v676 = vadd.f32 %v597, %v675
      %vm677 = vcmask 60416
      %678 = vst.msk [vmem:[#allocation4] sm:$0xf] %vm677, %v668
      %v679 = vld [vmem:[#allocation3] sm:$0x1]
      %v681 = vperm.slane %v679, 0
      %v683 = vadd.f32 %v676, %v681
      %vm684 = vcmask 3072
      %685 = vst.msk [vmem:[%s16] sm:$0xf] %vm684, %v683
    $region53: #{mtvae_forward.2} parent=1 // pred_fallthru
      _
    // Predicated region
    $region54: #{mtvae_forward.2} parent=1 // pred_check
      _
    $region55: #{mtvae_forward.2} parent=1 // pred_check_branch
      %687 = sbr.rel (0) target = $region57
    $region56: #{mtvae_forward.2} parent=1 // pred_region
      _
    $region57: #{mtvae_forward.2} parent=1 // pred_fallthru
      _
    // Predicated region
    $region58: #{mtvae_forward.2} parent=1 // pred_check
      _
    $region59: #{mtvae_forward.2} parent=1 // pred_check_branch
      %689 = sbr.rel (0) target = $region61
    $region60: #{mtvae_forward.2} parent=1 // pred_region
      _
    $region61: #{mtvae_forward.2} parent=1 // pred_fallthru
      _
    // Predicated region
    $region62: #{mtvae_forward.2} parent=1 // pred_check
      _
    $region63: #{mtvae_forward.2} parent=1 // pred_check_branch
      %691 = sbr.rel (0) target = $region65
    $region64: #{mtvae_forward.2} parent=1 // pred_region
      _
    $region65: #{mtvae_forward.2} parent=1 // pred_fallthru
      _
    // Predicated region
    $region66: #{mtvae_forward.2} parent=1 // pred_check
      _
    $region67: #{mtvae_forward.2} parent=1 // pred_check_branch
      %693 = sbr.rel (0) target = $region69
    $region68: #{mtvae_forward.2} parent=1 // pred_region
      _
    $region69: #{mtvae_forward.2} parent=1 // pred_fallthru
      _
    // Predicated region
    $region70: #{mtvae_forward.2} parent=1 // pred_check
      _
    $region71: #{mtvae_forward.2} parent=1 // pred_check_branch
      %695 = sbr.rel (0) target = $region73
    $region72: #{mtvae_forward.2} parent=1 // pred_region
      %697 = vsyncadd [#allocation5], 0
      %s699 = sshll.u32 [#allocation4], 4
      %s700 = int_to_ptr.vmem [resolvable:$true] %s699
      %s701 = sshll.u32 %s15, 4
      %s702 = int_to_ptr.hbm [resolvable:$true] %s701
      %704 = dma.vmem_to_hbm [thread:$0]  %s700, 64, %s702, [#allocation5]
    $region73: #{mtvae_forward.2} parent=1 // pred_fallthru
      _
    // Predicated region
    $region74: #{mtvae_forward.2} parent=1 // pred_check
      _
    $region75: #{mtvae_forward.2} parent=1 // pred_check_branch
      %706 = sbr.rel (0) target = $region77
    $region76: #{mtvae_forward.2} parent=1 // pred_region
      _
    $region77: #{mtvae_forward.2} parent=1 // pred_fallthru
      _
    // Predicated region
    $region78: #{mtvae_forward.2} parent=1 // pred_check
      _
    $region79: #{mtvae_forward.2} parent=1 // pred_check_branch
      %708 = sbr.rel (0) target = $region81
    $region80: #{mtvae_forward.2} parent=1 // pred_region
      _
    $region81: #{mtvae_forward.2} parent=1 // pred_fallthru
      _
    // Predicated region
    $region82: #{mtvae_forward.2} parent=1 // pred_check
      _
    $region83: #{mtvae_forward.2} parent=1 // pred_check_branch
      %710 = sbr.rel (0) target = $region85
    $region84: #{mtvae_forward.2} parent=1 // pred_region
      _
    $region85: #{mtvae_forward.2} parent=1 // pred_fallthru
      _
    // Predicated region
    $region86: #{mtvae_forward.2} parent=1 // pred_check
      _
    $region87: #{mtvae_forward.2} parent=1 // pred_check_branch
      %712 = sbr.rel (0) target = $region89
    $region88: #{mtvae_forward.2} parent=1 // pred_region
      _
    $region89: #{mtvae_forward.2} parent=1 // pred_fallthru
      _
    // Predicated region
    $region90: #{mtvae_forward.2} parent=1 // pred_check
      _
    $region91: #{mtvae_forward.2} parent=1 // pred_check_branch
      %714 = sbr.rel (0) target = $region93
    $region92: #{mtvae_forward.2} parent=1 // pred_region
      _
    $region93: #{mtvae_forward.2} parent=1 // pred_fallthru
      _
    // Predicated region
    $region94: #{mtvae_forward.2} parent=1 // pred_check
      _
    $region95: #{mtvae_forward.2} parent=1 // pred_check_branch
      %716 = sbr.rel (0) target = $region97
    $region96: #{mtvae_forward.2} parent=1 // pred_region
      %718 = dma.done [#allocation5], 64
    $region97: #{mtvae_forward.2} parent=1 // pred_fallthru
      _
    // Predicated region
    $region98: #{mtvae_forward.2} parent=1 // pred_check
      _
    $region99: #{mtvae_forward.2} parent=1 // pred_check_branch
      %720 = sbr.rel (0) target = $region101
    $region100: #{mtvae_forward.2} parent=1 // pred_region
      _
    $region101: #{mtvae_forward.2} parent=1 // pred_fallthru
      _
    %721 = vsyncpa [#allocation5], 1

</llo_original>
